<compile_context>
chip_gen: v5e
topology: v5e:2x2
jax: 0.10.0
libtpu: 0.0.40
codegen_flags: <defaults>
</compile_context>

<pallas_src>
import functools
from typing import NamedTuple, Optional

import jax
import jax.numpy as jnp
from jax.experimental import pallas as pl
from jax.experimental.pallas import tpu as pltpu


# ---------------------------------------------------------------------------
# Kernel bodies
# ---------------------------------------------------------------------------
def _mlp_kernel_acc(x_ref, wgu_ref, wd_ref, o_ref, acc_ref, *, tk):
    """Streaming SwiGLU MLP with a k-reduction over intermediate tiles.

    Grid = (seq_tiles, inter_tiles).  Axis 1 is the reduction axis of the down
    projection: the output block index is constant along it, so we accumulate
    into an f32 VMEM scratch and write back on the last step.
    """
    k = pl.program_id(1)

    @pl.when(k == 0)
    def _():
        acc_ref[...] = jnp.zeros_like(acc_ref)

    x = x_ref[...]                                                     # (tm, H)
    # One wide matmul over the packed [gate_k | up_k] slab; f32 out of the MXU.
    gu = jnp.dot(x, wgu_ref[...], preferred_element_type=jnp.float32)  # (tm, 2*tk)
    g = gu[:, :tk]
    u = gu[:, tk:]
    # SwiGLU elementwise kept in f32 (important on v5e: no bf16 VPU/EUP).
    h = (g * jax.nn.sigmoid(g)) * u                                    # (tm, tk)
    acc_ref[...] += jnp.dot(h.astype(wd_ref.dtype), wd_ref[...],
                            preferred_element_type=jnp.float32)        # (tm, H)

    @pl.when(k == pl.num_programs(1) - 1)
    def _():
        o_ref[...] = acc_ref[...].astype(o_ref.dtype)


def _mlp_kernel_resident(x_ref, wgu_ref, wd_ref, o_ref, *, tk):
    """Single-reduction-step SwiGLU MLP (whole intermediate dim per grid step).

    Used when the full weight set is VMEM-resident (tk == padded intermediate
    size): no accumulator scratch, no zero-init, no read-modify-write.
    """
    x = x_ref[...]                                                     # (tm, H)
    gu = jnp.dot(x, wgu_ref[...], preferred_element_type=jnp.float32)  # (tm, 2*Ip)
    g = gu[:, :tk]
    u = gu[:, tk:]
    h = (g * jax.nn.sigmoid(g)) * u
    o_ref[...] = jnp.dot(h.astype(wd_ref.dtype), wd_ref[...],
                         preferred_element_type=jnp.float32).astype(o_ref.dtype)


# ---------------------------------------------------------------------------
# Hardware model / tiling heuristics
# ---------------------------------------------------------------------------
_GEN_PARAMS = {
    # vmem: physical VMEM per TensorCore; tm/tk: roofline-balanced tile targets
    # (per-seq-tile compute 6*tm*H*I flops must cover the 6*H*I weight bytes
    # re-streamed per seq tile -> tm ~ peak_TFlops / HBM_TBps);
    # num_cores: TensorCores per chip (megacore sharding of the parallel axis).
    "v5e":     dict(vmem=128 << 20, tm_target=256, tk_target=512, num_cores=1),
    "v5p":     dict(vmem=128 << 20, tm_target=384, tk_target=512, num_cores=2),
    "v6e":     dict(vmem=128 << 20, tm_target=768, tk_target=512, num_cores=1),
    "v7x":     dict(vmem=64 << 20,  tm_target=768, tk_target=256, num_cores=2),
    "unknown": dict(vmem=64 << 20,  tm_target=256, tk_target=256, num_cores=2),
}


def _tpu_generation():
    try:
        kind = jax.devices()[0].device_kind.lower()
    except Exception:
        return "unknown"
    if "v6" in kind:
        return "v6e"
    if "v7" in kind or "tpu7" in kind:
        return "v7x"
    if "v5p" in kind:
        return "v5p"
    if "v5" in kind:
        return "v5e"
    return "unknown"


def _hw_params():
    hw = dict(_GEN_PARAMS[_tpu_generation()])
    try:  # prefer the real per-core VMEM capacity when the API exposes it
        hw["vmem"] = int(pltpu.get_tpu_info().vmem_capacity_bytes)
    except Exception:
        pass
    hw["budget"] = hw["vmem"] - (4 << 20)   # keep headroom below physical VMEM
    return hw


def _round_up(x, m):
    return (x + m - 1) // m * m


def _footprint(tm, tk, H, act_dsize, w_dsize, resident):
    """Conservative VMEM bytes for one grid step (incl. f32 temporaries)."""
    x_b = 2 * tm * H * act_dsize              # double-buffered x tile
    out_b = 2 * tm * H * act_dsize            # double-buffered out tile
    wgu_b = 2 * H * (2 * tk) * w_dsize        # packed [gate|up] slab (x2 buffers)
    wd_b = 2 * tk * H * w_dsize               # down-proj slab (x2 buffers)
    acc_b = 0 if resident else tm * H * 4     # f32 accumulator scratch
    gu_b = tm * (2 * tk) * 4                  # f32 MXU result of the wide matmul
    h_b = tm * tk * (4 + w_dsize)             # f32 h + cast-to-weight-dtype copy
    internal = 2 << 20                        # Mosaic internal scratch
    return x_b + out_b + wgu_b + wd_b + acc_b + gu_b + h_b + internal


def _choose_tk(H, I, act_dsize, w_dsize, hw, tk_hint):
    """Pick the intermediate tile and whether weights go fully VMEM-resident."""
    budget = hw["budget"]
    Ip128 = _round_up(I, 128)
    # Resident check at a modest tm: if the whole (padded, double-buffered)
    # weight set fits, use one reduction step and fetch weights exactly once.
    resident_ok = _footprint(256, Ip128, H, act_dsize, w_dsize, True) <= budget
    if tk_hint is None:
        if resident_ok:
            return True, Ip128
        tk = min(hw["tk_target"], Ip128)
    else:
        tk = max(128, min(int(tk_hint), Ip128)) // 128 * 128
        if tk >= Ip128:
            if resident_ok:
                return True, Ip128
            tk = min(hw["tk_target"], Ip128)
    tk = max(128, tk // 128 * 128)
    # Shrink tk (never tm) until the target-tm footprint fits the budget:
    # total weight traffic does not depend on tk, so this is free.
    while tk > 128 and _footprint(hw["tm_target"], tk, H, act_dsize, w_dsize,
                                  False) > budget:
        tk = max(128, (tk // 2) // 128 * 128)
    return False, tk


def _choose_tm(S, H, tk, act_dsize, w_dsize, resident, hw, tm_hint):
    tm = hw["tm_target"] if tm_hint is None else int(tm_hint)
    tm = max(16, min(tm, 1024, _round_up(S, 16)))
    # Megacore: keep at least one seq tile per TensorCore when S is big enough.
    nc = hw["num_cores"]
    if nc > 1 and S >= nc * 128:
        tm = min(tm, _round_up(-(-S // nc), 16))
    tm = _round_up(tm, 16)
    # Shrink tm only as a last resort if this (tm, tk) pair overshoots VMEM.
    while tm > 128 and _footprint(tm, tk, H, act_dsize, w_dsize,
                                  resident) > hw["budget"]:
        tm = max(128, _round_up(tm // 2, 16))
    return tm
    # TODO(synk): for decode-like shapes (grid[0]==1) on v7x, split the
    # reduction axis across the two TensorCores with per-core accumulators.


# ---------------------------------------------------------------------------
# Weight preparation (do ONCE at weight-load time, not per forward call)
# ---------------------------------------------------------------------------
def _pack_gate_up(w_gate, w_up, tk):
    """(H, Ip)+(H, Ip) -> (H, 2*Ip) laid out as [g_0|u_0|g_1|u_1|...] in tk blocks."""
    H, Ip = w_gate.shape
    nk = Ip // tk
    wg = w_gate.reshape(H, nk, tk)
    wu = w_up.reshape(H, nk, tk)
    return jnp.concatenate([wg, wu], axis=-1).reshape(H, 2 * Ip)


class PackedMLPWeights(NamedTuple):
    w_gu: jax.Array        # (H, 2*Ip)  packed, tk-block-interleaved [gate|up]
    w_down: jax.Array      # (Ip, H)
    tk: int                # intermediate tile (== Ip when resident)
    resident: bool         # whole weight set fits VMEM -> single reduction step


def prepare_qwen25_vl_mlp_weights(w_gate, w_up, w_down, *, tk: Optional[int] = None):
    """Pad + pack the MLP weights once, at weight-load time.

    w_gate, w_up: (H, I); w_down: (I, H)   (transpose of PyTorch nn.Linear.weight)
    """
    H, I = w_gate.shape
    w_dsize = jnp.dtype(w_gate.dtype).itemsize
    hw = _hw_params()
    # Activation dtype unknown here; assume it matches the weights for sizing.
    resident, tk = _choose_tk(H, I, w_dsize, w_dsize, hw, tk)
    Ip = _round_up(I, 128) if resident else _round_up(I, tk)
    if Ip != I:
        # Zero gate/up columns give h == 0; zero down rows contribute nothing.
        w_gate = jnp.pad(w_gate, ((0, 0), (0, Ip - I)))
        w_up = jnp.pad(w_up, ((0, 0), (0, Ip - I)))
        w_down = jnp.pad(w_down, ((0, Ip - I), (0, 0)))
    w_gu = _pack_gate_up(w_gate, w_up, tk)
    # TODO(synk): optionally quantize the packed weights to fp8 on v7x (MXU-
    # native) to halve weight HBM traffic in the decode / small-S regime.
    return PackedMLPWeights(w_gu=w_gu, w_down=w_down, tk=int(tk),
                            resident=bool(resident))


# ---------------------------------------------------------------------------
# pallas_call wrappers (jitted, static tiling)
# ---------------------------------------------------------------------------
@functools.partial(jax.jit, static_argnames=("tm", "tk", "vmem_limit_bytes"))
def _mlp_stream_call(x_p, w_gu, w_d, *, tm, tk, vmem_limit_bytes):
    Sp, H = x_p.shape
    Ip = w_d.shape[0]
    grid = (Sp // tm, Ip // tk)
    act_dsize = jnp.dtype(x_p.dtype).itemsize
    w_dsize = jnp.dtype(w_gu.dtype).itemsize
    cost = pl.CostEstimate(
        flops=int(6 * Sp * H * Ip),                 # three matmuls, 2*S*H*I each
        transcendentals=int(Sp * Ip),               # one sigmoid per inter elem
        # Weights re-streamed once per seq tile in this path.
        bytes_accessed=int(grid[0] * 3 * H * Ip * w_dsize + 2 * Sp * H * act_dsize),
    )
    return pl.pallas_call(
        functools.partial(_mlp_kernel_acc, tk=tk),
        out_shape=jax.ShapeDtypeStruct((Sp, H), x_p.dtype),
        grid_spec=pltpu.PrefetchScalarGridSpec(
            num_scalar_prefetch=0,
            grid=grid,
            in_specs=[
                pl.BlockSpec((tm, H), lambda i, k: (i, 0)),       # x tile
                pl.BlockSpec((H, 2 * tk), lambda i, k: (0, k)),   # [gate_k|up_k]
                pl.BlockSpec((tk, H), lambda i, k: (k, 0)),       # down-proj slab
            ],
            out_specs=pl.BlockSpec((tm, H), lambda i, k: (i, 0)),
            scratch_shapes=[pltpu.VMEM((tm, H), jnp.float32)],
        ),
        compiler_params=pltpu.CompilerParams(
            dimension_semantics=("parallel", "arbitrary"),
            vmem_limit_bytes=vmem_limit_bytes,
        ),
        cost_estimate=cost,
    )(x_p, w_gu, w_d)


@functools.partial(jax.jit, static_argnames=("tm", "tk", "vmem_limit_bytes"))
def _mlp_resident_call(x_p, w_gu, w_d, *, tm, tk, vmem_limit_bytes):
    Sp, H = x_p.shape
    Ip = w_d.shape[0]
    act_dsize = jnp.dtype(x_p.dtype).itemsize
    w_dsize = jnp.dtype(w_gu.dtype).itemsize
    cost = pl.CostEstimate(
        flops=int(6 * Sp * H * Ip),
        transcendentals=int(Sp * Ip),
        # Constant weight block index -> weights fetched exactly once.
        bytes_accessed=int(3 * H * Ip * w_dsize + 2 * Sp * H * act_dsize),
    )
    # TODO(synk): pipeline_mode=pl.Buffered(1) on the two weight specs would
    # drop their (unused) second VMEM buffer; omitted here to stay on the most
    # conservative lowering path (the footprint model assumes 2 buffers).
    return pl.pallas_call(
        functools.partial(_mlp_kernel_resident, tk=tk),
        out_shape=jax.ShapeDtypeStruct((Sp, H), x_p.dtype),
        grid_spec=pltpu.PrefetchScalarGridSpec(
            num_scalar_prefetch=0,
            grid=(Sp // tm,),
            in_specs=[
                pl.BlockSpec((tm, H), lambda i: (i, 0)),          # x tile
                pl.BlockSpec((H, 2 * tk), lambda i: (0, 0)),      # resident [gate|up]
                pl.BlockSpec((tk, H), lambda i: (0, 0)),          # resident down
            ],
            out_specs=pl.BlockSpec((tm, H), lambda i: (i, 0)),
        ),
        compiler_params=pltpu.CompilerParams(
            dimension_semantics=("parallel",),
            vmem_limit_bytes=vmem_limit_bytes,
        ),
        cost_estimate=cost,
    )(x_p, w_gu, w_d)


# ---------------------------------------------------------------------------
# Forward-pass entry points
# ---------------------------------------------------------------------------
def qwen25_vl_mlp_packed(x, packed: PackedMLPWeights, *, tm: Optional[int] = None):
    """SwiGLU MLP forward using pre-packed weights (hot path, no weight copies)."""
    orig_shape = x.shape
    H = orig_shape[-1]
    x2 = x.reshape(-1, H)
    S = x2.shape[0]
    act_dsize = jnp.dtype(x.dtype).itemsize
    w_dsize = jnp.dtype(packed.w_gu.dtype).itemsize

    hw = _hw_params()
    tm = _choose_tm(S, H, packed.tk, act_dsize, w_dsize, packed.resident, hw, tm)
    Sp = _round_up(S, tm)
    if Sp != S:
        x2 = jnp.pad(x2, ((0, Sp - S), (0, 0)))   # zero rows pass through harmlessly

    fp = _footprint(tm, packed.tk, H, act_dsize, w_dsize, packed.resident)
    vmem_limit = int(min(hw["vmem"] - (4 << 20), max(32 << 20, fp + (4 << 20))))

    call = _mlp_resident_call if packed.resident else _mlp_stream_call
    out = call(x2, packed.w_gu, packed.w_down,
               tm=tm, tk=packed.tk, vmem_limit_bytes=vmem_limit)
    if Sp != S:
        out = out[:S]
    return out.reshape(orig_shape)


def qwen25_vl_mlp(x, w_gate, w_up, w_down, *, tm=None, tk=None):
    """Convenience one-shot API:  down_proj( silu(x @ w_gate) * (x @ w_up) ).

    NOTE: this packs/pads the weights on every call (≈3 full weight HBM copies);
    in production call prepare_qwen25_vl_mlp_weights() once at weight-load time
    and use qwen25_vl_mlp_packed() in the forward pass.
    """
    packed = prepare_qwen25_vl_mlp_weights(w_gate, w_up, w_down, tk=tk)
    return qwen25_vl_mlp_packed(x, packed, tm=tm)


# ---------------------------------------------------------------------------
# Reference + smoke test
# ---------------------------------------------------------------------------
def _reference_mlp(x, w_gate, w_up, w_down, inter_dtype):
    xf = x.astype(jnp.float32)
    g = xf @ w_gate.astype(jnp.float32)
    u = xf @ w_up.astype(jnp.float32)
    h = (jax.nn.silu(g) * u).astype(inter_dtype).astype(jnp.float32)
    return (h @ w_down.astype(jnp.float32)).astype(x.dtype)


if __name__ == "__main__":
    # Small synthetic config consistent with the module (hidden_act="silu").
    # SEQ deliberately not a multiple of the seq tile, INTER not a multiple of
    # 128, to exercise padding, the resident single-step path and the streaming
    # multi-step accumulator path.
    SEQ, HIDDEN, INTER = 203, 128, 320

    key = jax.random.PRNGKey(0)
    kx, kg, ku, kd = jax.random.split(key, 4)

    dt = jnp.bfloat16
    x = jax.random.normal(kx, (SEQ, HIDDEN), dtype=jnp.float32).astype(dt)
    # Deterministic "Linear" weights, stored (in, out) = PyTorch weight.T.
    w_gate = (jax.random.normal(kg, (HIDDEN, INTER), dtype=jnp.float32) * 0.02).astype(dt)
    w_up = (jax.random.normal(ku, (HIDDEN, INTER), dtype=jnp.float32) * 0.02).astype(dt)
    w_down = (jax.random.normal(kd, (INTER, HIDDEN), dtype=jnp.float32) * 0.02).astype(dt)

    ref = _reference_mlp(x, w_gate, w_up, w_down, inter_dtype=dt)

    # 1) Production path: pack weights once, auto tiling.  Small weights ->
    #    VMEM-resident single-reduction-step kernel.
    packed = prepare_qwen25_vl_mlp_weights(w_gate, w_up, w_down)
    out_resident = jax.block_until_ready(qwen25_vl_mlp_packed(x, packed))
    assert out_resident.shape == (SEQ, HIDDEN) and out_resident.dtype == dt
    assert jnp.allclose(out_resident.astype(jnp.float32), ref.astype(jnp.float32),
                        atol=2e-2, rtol=2e-2), "resident path mismatch vs reference"

    # 2) Streaming accumulator path: force small tiles so the grid has multiple
    #    seq tiles and multiple reduction steps.
    out_stream = jax.block_until_ready(
        qwen25_vl_mlp(x, w_gate, w_up, w_down, tm=128, tk=128))
    assert out_stream.shape == (SEQ, HIDDEN) and out_stream.dtype == dt
    assert jnp.allclose(out_stream.astype(jnp.float32), ref.astype(jnp.float32),
                        atol=2e-2, rtol=2e-2), "streaming path mismatch vs reference"

    print("KERNEL_OK")
</pallas_src>

<mosaic_0001>
module attributes {stable_mosaic.version = 11 : i64} {
  func.func @_mlp_kernel_resident(%arg0: i32, %arg1: memref<208x128xbf16, #tpu.memory_space<vmem>>, %arg2: memref<128x768xbf16, #tpu.memory_space<vmem>>, %arg3: memref<384x128xbf16, #tpu.memory_space<vmem>>, %arg4: memref<208x128xbf16, #tpu.memory_space<vmem>>) attributes {dimension_semantics = [#tpu.dimension_semantics<parallel>], iteration_bounds = array<i64: 1>, scalar_prefetch = 0 : i64, scratch_operands = 0 : i64, tpu.core_type = #tpu.core_type<tc>, window_params = [{transform_indices = @transform_0, window_bounds = array<i64: 208, 128>}, {pipeline_mode = #tpu.pipeline_mode<synchronous>, transform_indices = @transform_1, window_bounds = array<i64: 128, 768>}, {pipeline_mode = #tpu.pipeline_mode<synchronous>, transform_indices = @transform_2, window_bounds = array<i64: 384, 128>}, {transform_indices = @transform_3, window_bounds = array<i64: 208, 128>}]} {
    %c0 = arith.constant 0 : index
    %c0_0 = arith.constant 0 : index
    %0 = vector.load %arg1[%c0, %c0_0] : memref<208x128xbf16, #tpu.memory_space<vmem>>, vector<208x128xbf16>
    %c0_1 = arith.constant 0 : index
    %c0_2 = arith.constant 0 : index
    %1 = vector.load %arg2[%c0_1, %c0_2] : memref<128x768xbf16, #tpu.memory_space<vmem>>, vector<128x768xbf16>
    %cst = arith.constant dense<0.000000e+00> : vector<208x768xf32>
    %2 = tpu.matmul %0, %1, %cst {dimension_numbers = #tpu.dot_dimension_numbers<[1], [0], [0], [1], [0, 0, 1, 1], [], []>} : vector<208x128xbf16>, vector<128x768xbf16>, vector<208x768xf32> -> vector<208x768xf32>
    %3 = vector.extract_strided_slice %2 {offsets = [0, 0], sizes = [208, 384], strides = [1, 1]} : vector<208x768xf32> to vector<208x384xf32>
    %4 = vector.extract_strided_slice %2 {offsets = [0, 384], sizes = [208, 384], strides = [1, 1]} : vector<208x768xf32> to vector<208x384xf32>
    %5 = arith.negf %3 : vector<208x384xf32>
    %6 = math.exp %5 : vector<208x384xf32>
    %cst_3 = arith.constant 1.000000e+00 : f32
    %7 = vector.broadcast %cst_3 : f32 to vector<208x384xf32>
    %8 = arith.addf %7, %6 : vector<208x384xf32>
    %9 = arith.divf %7, %8 : vector<208x384xf32>
    %10 = arith.mulf %3, %9 : vector<208x384xf32>
    %11 = arith.mulf %10, %4 : vector<208x384xf32>
    %12 = arith.truncf %11 : vector<208x384xf32> to vector<208x384xbf16>
    %c0_4 = arith.constant 0 : index
    %c0_5 = arith.constant 0 : index
    %13 = vector.load %arg3[%c0_4, %c0_5] : memref<384x128xbf16, #tpu.memory_space<vmem>>, vector<384x128xbf16>
    %cst_6 = arith.constant dense<0.000000e+00> : vector<208x128xf32>
    %14 = tpu.matmul %12, %13, %cst_6 {dimension_numbers = #tpu.dot_dimension_numbers<[1], [0], [0], [1], [0, 0, 1, 1], [], []>} : vector<208x384xbf16>, vector<384x128xbf16>, vector<208x128xf32> -> vector<208x128xf32>
    %15 = arith.truncf %14 : vector<208x128xf32> to vector<208x128xbf16>
    %c0_7 = arith.constant 0 : index
    %c0_8 = arith.constant 0 : index
    %16 = vector.load %arg4[%c0_7, %c0_8] : memref<208x128xbf16, #tpu.memory_space<vmem>>, vector<208x128xbf16>
    tpu.vector_store %arg4[%c0_7, %c0_8], %15 {strides = array<i32>} : memref<208x128xbf16, #tpu.memory_space<vmem>>, vector<208x128xbf16>,
    return
  }
  func.func @transform_0(%arg0: i32) -> (i32, i32) {
    %c0_i32 = arith.constant 0 : i32
    %c0_i32_0 = arith.constant 0 : i32
    return %arg0, %c0_i32 : i32, i32
  }
  func.func @transform_1(%arg0: i32) -> (i32, i32) {
    %c0_i32 = arith.constant 0 : i32
    %c0_i32_0 = arith.constant 0 : i32
    %c0_i32_1 = arith.constant 0 : i32
    return %c0_i32, %c0_i32_0 : i32, i32
  }
  func.func @transform_2(%arg0: i32) -> (i32, i32) {
    %c0_i32 = arith.constant 0 : i32
    %c0_i32_0 = arith.constant 0 : i32
    %c0_i32_1 = arith.constant 0 : i32
    return %c0_i32, %c0_i32_0 : i32, i32
  }
  func.func @transform_3(%arg0: i32) -> (i32, i32) {
    %c0_i32 = arith.constant 0 : i32
    %c0_i32_0 = arith.constant 0 : i32
    return %arg0, %c0_i32 : i32, i32
  }
}

</mosaic_0001>

<llo_original>
// kernel: _mlp_resident_call.1
$region0: #{_mlp_resident_call.1}
  #allocation0 [shape = 'u32[]', space=smem, size = 0x4, offset = 0x4, fixed_abs, tag = 'smem constant byte address 0x4 - core index']
  #allocation1 [shape = 'u32[72,128]{1,0:T(1,128)}', space=vmem, size = 0x9000, scoped, tag = 'internal scratch']
  %s0 = inlined_call_operand.hbm [shape: bf16[208,128], index: 0, kind: input, shape index: {}]
  %s1 = inlined_call_operand.hbm [shape: bf16[128,768], index: 1, kind: input, shape index: {}]
  %s2 = inlined_call_operand.hbm [shape: bf16[384,128], index: 2, kind: input, shape index: {}]
  %s3 = inlined_call_operand.hbm [shape: bf16[208,128], index: 3, kind: output, shape index: {}]
  %s4 = sld [smem:[#allocation0]]
  $region34: #{_mlp_resident_call.1} parent=0
    _
  %s6 = ssub.s32 1, %s4
  %s7 = scalar_select 0, %s6, %s4
  $region1: #{_mlp_resident_call.1} parent=0
    #allocation2 [shape = 'u8[53248]{0}', space=vmem, size = 0xd000, scoped, tag = 'input window, operand 0, single buffered']
    #allocation3 [shape = 's32[1]{0}', space=sflag, size = 0x4, scoped, tag = 'scoped memory for _mlp_resident_call.1']
    #allocation4 [shape = 's32[1]{0}', space=sflag, size = 0x4, scoped, tag = 'scoped memory for _mlp_resident_call.1']
    #allocation5 [shape = 'u8[196608]{0}', space=vmem, size = 0x30000, scoped, tag = 'input window, operand 1, single buffered']
    #allocation6 [shape = 's32[1]{0}', space=sflag, size = 0x4, scoped, tag = 'scoped memory for _mlp_resident_call.1']
    #allocation7 [shape = 'u8[98304]{0}', space=vmem, size = 0x18000, scoped, tag = 'input window, operand 2, single buffered']
    #allocation8 [shape = 'u8[53248]{0}', space=vmem, size = 0xd000, scoped, tag = 'output window, operand 0, single buffered']
    %8 = vsyncpa [#allocation3], 0
    %9 = vsyncpa [#allocation6], 0
    %10 = vsyncpa [#allocation4], 0
    // Predicated region
    $region2: #{_mlp_resident_call.1} parent=1 // pred_check
      _
    $region3: #{_mlp_resident_call.1} parent=1 // pred_check_branch
      %12 = sbr.rel (0) target = $region5
    $region4: #{_mlp_resident_call.1} parent=1 // pred_region
      %14 = vsyncadd [#allocation3], 0
      %s15 = sshll.u32 %s0, 4
      %s16 = int_to_ptr.hbm [resolvable:$true] %s15
      %s17 = sshll.u32 [#allocation2], 4
      %s18 = int_to_ptr.vmem [resolvable:$true] %s17
      %23 = dma.hbm_to_vmem [thread:$0]  %s16, 1664, %s18, [#allocation3], 64, 64, 4
    $region5: #{_mlp_resident_call.1} parent=1 // pred_fallthru
      _
    // Predicated region
    $region6: #{_mlp_resident_call.1} parent=1 // pred_check
      _
    $region7: #{_mlp_resident_call.1} parent=1 // pred_check_branch
      %25 = sbr.rel (0) target = $region9
    $region8: #{_mlp_resident_call.1} parent=1 // pred_region
      %27 = vsyncadd [#allocation6], 0
      %s28 = sshll.u32 %s1, 4
      %s29 = int_to_ptr.hbm [resolvable:$true] %s28
      %s30 = sshll.u32 [#allocation5], 4
      %s31 = int_to_ptr.vmem [resolvable:$true] %s30
      %36 = dma.hbm_to_vmem [thread:$0]  %s29, 6144, %s31, [#allocation6], 384, 384, 24
    $region9: #{_mlp_resident_call.1} parent=1 // pred_fallthru
      _
    // Predicated region
    $region10: #{_mlp_resident_call.1} parent=1 // pred_check
      _
    $region11: #{_mlp_resident_call.1} parent=1 // pred_check_branch
      %38 = sbr.rel (0) target = $region13
    $region12: #{_mlp_resident_call.1} parent=1 // pred_region
      %40 = vsyncadd [#allocation6], 0
      %s41 = sshll.u32 %s2, 4
      %s42 = int_to_ptr.hbm [resolvable:$true] %s41
      %s43 = sshll.u32 [#allocation7], 4
      %s44 = int_to_ptr.vmem [resolvable:$true] %s43
      %49 = dma.hbm_to_vmem [thread:$0]  %s42, 3072, %s44, [#allocation6], 64, 64, 4
    $region13: #{_mlp_resident_call.1} parent=1 // pred_fallthru
      _
    // Predicated region
    $region14: #{_mlp_resident_call.1} parent=1 // pred_check
      _
    $region15: #{_mlp_resident_call.1} parent=1 // pred_check_branch
      %51 = sbr.rel (0) target = $region17
    $region16: #{_mlp_resident_call.1} parent=1 // pred_region
      %53 = dma.done [#allocation3], 1664
    $region17: #{_mlp_resident_call.1} parent=1 // pred_fallthru
      _
    // Predicated region
    $region18: #{_mlp_resident_call.1} parent=1 // pred_check
      _
    $region19: #{_mlp_resident_call.1} parent=1 // pred_check_branch
      %55 = sbr.rel (0) target = $region21
    $region20: #{_mlp_resident_call.1} parent=1 // pred_region
      %57 = dma.done [#allocation6], 6144
    $region21: #{_mlp_resident_call.1} parent=1 // pred_fallthru
      _
    // Predicated region
    $region22: #{_mlp_resident_call.1} parent=1 // pred_check
      _
    $region23: #{_mlp_resident_call.1} parent=1 // pred_check_branch
      %59 = sbr.rel (0) target = $region25
    $region24: #{_mlp_resident_call.1} parent=1 // pred_region
      %61 = dma.done [#allocation6], 3072
    $region25: #{_mlp_resident_call.1} parent=1 // pred_fallthru
      _
    %v62 = vld [vmem:[#allocation2] sm:$0xf]
    %v63 = vld [vmem:[#allocation2 + $0x4] sm:$0xf]
    %v64 = vld [vmem:[#allocation2 + $0x8] sm:$0xf]
    %v65 = vld [vmem:[#allocation2 + $0xc] sm:$0xf]
    %v66 = vld [vmem:[#allocation2 + $0x10] sm:$0xf]
    %v67 = vld [vmem:[#allocation2 + $0x14] sm:$0xf]
    %v68 = vld [vmem:[#allocation2 + $0x18] sm:$0xf]
    %v69 = vld [vmem:[#allocation2 + $0x1c] sm:$0xf]
    %v70 = vld [vmem:[#allocation2 + $0x20] sm:$0xf]
    %v71 = vld [vmem:[#allocation2 + $0x24] sm:$0xf]
    %v72 = vld [vmem:[#allocation2 + $0x28] sm:$0xf]
    %v73 = vld [vmem:[#allocation2 + $0x2c] sm:$0xf]
    %v74 = vld [vmem:[#allocation2 + $0x30] sm:$0xf]
    %v75 = vld [vmem:[#allocation2 + $0x34] sm:$0xf]
    %v76 = vld [vmem:[#allocation2 + $0x38] sm:$0xf]
    %v77 = vld [vmem:[#allocation2 + $0x3c] sm:$0xf]
    %v78 = vld [vmem:[#allocation2 + $0x40] sm:$0xf]
    %v79 = vld [vmem:[#allocation2 + $0x44] sm:$0xf]
    %v80 = vld [vmem:[#allocation2 + $0x48] sm:$0xf]
    %v81 = vld [vmem:[#allocation2 + $0x4c] sm:$0xf]
    %v82 = vld [vmem:[#allocation2 + $0x50] sm:$0xf]
    %v83 = vld [vmem:[#allocation2 + $0x54] sm:$0xf]
    %v84 = vld [vmem:[#allocation2 + $0x58] sm:$0xf]
    %v85 = vld [vmem:[#allocation2 + $0x5c] sm:$0xf]
    %v86 = vld [vmem:[#allocation2 + $0x60] sm:$0xf]
    %v87 = vld [vmem:[#allocation2 + $0x64] sm:$0xf]
    %v88 = vld [vmem:[#allocation5] sm:$0xff]
    %v89 = vld [vmem:[#allocation5 + $0x8] sm:$0xff]
    %v90 = vld [vmem:[#allocation5 + $0x10] sm:$0xff]
    %v91 = vld [vmem:[#allocation5 + $0x18] sm:$0xff]
    %v92 = vld [vmem:[#allocation5 + $0x20] sm:$0xff]
    %v93 = vld [vmem:[#allocation5 + $0x28] sm:$0xff]
    %v94 = vld [vmem:[#allocation5 + $0x30] sm:$0xff]
    %v95 = vld [vmem:[#allocation5 + $0x38] sm:$0xff]
    %v96 = vld [vmem:[#allocation5 + $0x40] sm:$0xff]
    %v97 = vld [vmem:[#allocation5 + $0x48] sm:$0xff]
    %v98 = vld [vmem:[#allocation5 + $0x50] sm:$0xff]
    %v99 = vld [vmem:[#allocation5 + $0x58] sm:$0xff]
    %v100 = vld [vmem:[#allocation5 + $0x60] sm:$0xff]
    %v101 = vld [vmem:[#allocation5 + $0x68] sm:$0xff]
    %v102 = vld [vmem:[#allocation5 + $0x70] sm:$0xff]
    %v103 = vld [vmem:[#allocation5 + $0x78] sm:$0xff]
    %v104 = vld [vmem:[#allocation5 + $0x80] sm:$0xff]
    %v105 = vld [vmem:[#allocation5 + $0x88] sm:$0xff]
    %v106 = vld [vmem:[#allocation5 + $0x90] sm:$0xff]
    %v107 = vld [vmem:[#allocation5 + $0x98] sm:$0xff]
    %v108 = vld [vmem:[#allocation5 + $0xa0] sm:$0xff]
    %v109 = vld [vmem:[#allocation5 + $0xa8] sm:$0xff]
    %v110 = vld [vmem:[#allocation5 + $0xb0] sm:$0xff]
    %v111 = vld [vmem:[#allocation5 + $0xb8] sm:$0xff]
    %v112 = vld [vmem:[#allocation5 + $0xc0] sm:$0xff]
    %v113 = vld [vmem:[#allocation5 + $0xc8] sm:$0xff]
    %v114 = vld [vmem:[#allocation5 + $0xd0] sm:$0xff]
    %v115 = vld [vmem:[#allocation5 + $0xd8] sm:$0xff]
    %v116 = vld [vmem:[#allocation5 + $0xe0] sm:$0xff]
    %v117 = vld [vmem:[#allocation5 + $0xe8] sm:$0xff]
    %v118 = vld [vmem:[#allocation5 + $0xf0] sm:$0xff]
    %v119 = vld [vmem:[#allocation5 + $0xf8] sm:$0xff]
    %v120 = vld [vmem:[#allocation5 + $0x100] sm:$0xff]
    %v121 = vld [vmem:[#allocation5 + $0x108] sm:$0xff]
    %v122 = vld [vmem:[#allocation5 + $0x110] sm:$0xff]
    %v123 = vld [vmem:[#allocation5 + $0x118] sm:$0xff]
    %v124 = vld [vmem:[#allocation5 + $0x120] sm:$0xff]
    %v125 = vld [vmem:[#allocation5 + $0x128] sm:$0xff]
    %v126 = vld [vmem:[#allocation5 + $0x130] sm:$0xff]
    %v127 = vld [vmem:[#allocation5 + $0x138] sm:$0xff]
    %v128 = vld [vmem:[#allocation5 + $0x140] sm:$0xff]
    %v129 = vld [vmem:[#allocation5 + $0x148] sm:$0xff]
    %v130 = vld [vmem:[#allocation5 + $0x150] sm:$0xff]
    %v131 = vld [vmem:[#allocation5 + $0x158] sm:$0xff]
    %v132 = vld [vmem:[#allocation5 + $0x160] sm:$0xff]
    %v133 = vld [vmem:[#allocation5 + $0x168] sm:$0xff]
    %v134 = vld [vmem:[#allocation5 + $0x170] sm:$0xff]
    %v135 = vld [vmem:[#allocation5 + $0x178] sm:$0xff]
    %v162 = vunpack.c.l.b16 %v62
    %v163 = vunpack.c.l.b16 %v63
    %v164 = vunpack.c.l.b16 %v64
    %v165 = vunpack.c.l.b16 %v65
    %v166 = vunpack.c.l.b16 %v66
    %v167 = vunpack.c.l.b16 %v67
    %v168 = vunpack.c.l.b16 %v68
    %v169 = vunpack.c.l.b16 %v69
    %v170 = vunpack.c.l.b16 %v70
    %v171 = vunpack.c.l.b16 %v71
    %v172 = vunpack.c.l.b16 %v72
    %v173 = vunpack.c.l.b16 %v73
    %v174 = vunpack.c.l.b16 %v74
    %v175 = vunpack.c.l.b16 %v75
    %v176 = vunpack.c.l.b16 %v76
    %v177 = vunpack.c.l.b16 %v77
    %v178 = vunpack.c.l.b16 %v78
    %v179 = vunpack.c.l.b16 %v79
    %v180 = vunpack.c.l.b16 %v80
    %v181 = vunpack.c.l.b16 %v81
    %v182 = vunpack.c.l.b16 %v82
    %v183 = vunpack.c.l.b16 %v83
    %v184 = vunpack.c.l.b16 %v84
    %v185 = vunpack.c.l.b16 %v85
    %v186 = vunpack.c.l.b16 %v86
    %v187 = vunpack.c.l.b16 %v87
    %v188 = vpack.c.b16 %v163, %v162
    %v189 = vpack.c.b16 %v165, %v164
    %v190 = vpack.c.b16 %v167, %v166
    %v191 = vpack.c.b16 %v169, %v168
    %v192 = vpack.c.b16 %v171, %v170
    %v193 = vpack.c.b16 %v173, %v172
    %v194 = vpack.c.b16 %v175, %v174
    %v195 = vpack.c.b16 %v177, %v176
    %v196 = vpack.c.b16 %v179, %v178
    %v197 = vpack.c.b16 %v181, %v180
    %v198 = vpack.c.b16 %v183, %v182
    %v199 = vpack.c.b16 %v185, %v184
    %v200 = vpack.c.b16 %v187, %v186
    %v262 = vunpack.c.l.b16 %v88
    %v263 = vunpack.c.h.b16 %v88
    %v264 = vunpack.c.l.b16 %v89
    %v265 = vunpack.c.h.b16 %v89
    %v266 = vunpack.c.l.b16 %v90
    %v267 = vunpack.c.h.b16 %v90
    %v268 = vunpack.c.l.b16 %v91
    %v269 = vunpack.c.h.b16 %v91
    %v270 = vunpack.c.l.b16 %v92
    %v271 = vunpack.c.h.b16 %v92
    %v272 = vunpack.c.l.b16 %v93
    %v273 = vunpack.c.h.b16 %v93
    %v274 = vunpack.c.l.b16 %v94
    %v275 = vunpack.c.h.b16 %v94
    %v276 = vunpack.c.l.b16 %v95
    %v277 = vunpack.c.h.b16 %v95
    %v278 = vunpack.c.l.b16 %v96
    %v279 = vunpack.c.h.b16 %v96
    %v280 = vunpack.c.l.b16 %v97
    %v281 = vunpack.c.h.b16 %v97
    %v282 = vunpack.c.l.b16 %v98
    %v283 = vunpack.c.h.b16 %v98
    %v284 = vunpack.c.l.b16 %v99
    %v285 = vunpack.c.h.b16 %v99
    %v286 = vunpack.c.l.b16 %v100
    %v287 = vunpack.c.h.b16 %v100
    %v288 = vunpack.c.l.b16 %v101
    %v289 = vunpack.c.h.b16 %v101
    %v290 = vunpack.c.l.b16 %v102
    %v291 = vunpack.c.h.b16 %v102
    %v292 = vunpack.c.l.b16 %v103
    %v293 = vunpack.c.h.b16 %v103
    %v294 = vunpack.c.l.b16 %v104
    %v295 = vunpack.c.h.b16 %v104
    %v296 = vunpack.c.l.b16 %v105
    %v297 = vunpack.c.h.b16 %v105
    %v298 = vunpack.c.l.b16 %v106
    %v299 = vunpack.c.h.b16 %v106
    %v300 = vunpack.c.l.b16 %v107
    %v301 = vunpack.c.h.b16 %v107
    %v302 = vunpack.c.l.b16 %v108
    %v303 = vunpack.c.h.b16 %v108
    %v304 = vunpack.c.l.b16 %v109
    %v305 = vunpack.c.h.b16 %v109
    %v306 = vunpack.c.l.b16 %v110
    %v307 = vunpack.c.h.b16 %v110
    %v308 = vunpack.c.l.b16 %v111
    %v309 = vunpack.c.h.b16 %v111
    %v310 = vunpack.c.l.b16 %v112
    %v311 = vunpack.c.h.b16 %v112
    %v312 = vunpack.c.l.b16 %v113
    %v313 = vunpack.c.h.b16 %v113
    %v314 = vunpack.c.l.b16 %v114
    %v315 = vunpack.c.h.b16 %v114
    %v316 = vunpack.c.l.b16 %v115
    %v317 = vunpack.c.h.b16 %v115
    %v318 = vunpack.c.l.b16 %v116
    %v319 = vunpack.c.h.b16 %v116
    %v320 = vunpack.c.l.b16 %v117
    %v321 = vunpack.c.h.b16 %v117
    %v322 = vunpack.c.l.b16 %v118
    %v323 = vunpack.c.h.b16 %v118
    %v324 = vunpack.c.l.b16 %v119
    %v325 = vunpack.c.h.b16 %v119
    %v326 = vunpack.c.l.b16 %v120
    %v327 = vunpack.c.h.b16 %v120
    %v328 = vunpack.c.l.b16 %v121
    %v329 = vunpack.c.h.b16 %v121
    %v330 = vunpack.c.l.b16 %v122
    %v331 = vunpack.c.h.b16 %v122
    %v332 = vunpack.c.l.b16 %v123
    %v333 = vunpack.c.h.b16 %v123
    %v334 = vunpack.c.l.b16 %v124
    %v335 = vunpack.c.h.b16 %v124
    %v336 = vunpack.c.l.b16 %v125
    %v337 = vunpack.c.h.b16 %v125
    %v338 = vunpack.c.l.b16 %v126
    %v339 = vunpack.c.h.b16 %v126
    %v340 = vunpack.c.l.b16 %v127
    %v341 = vunpack.c.h.b16 %v127
    %v342 = vunpack.c.l.b16 %v128
    %v343 = vunpack.c.h.b16 %v128
    %v344 = vunpack.c.l.b16 %v129
    %v345 = vunpack.c.h.b16 %v129
    %v346 = vunpack.c.l.b16 %v130
    %v347 = vunpack.c.h.b16 %v130
    %v348 = vunpack.c.l.b16 %v131
    %v349 = vunpack.c.h.b16 %v131
    %v350 = vunpack.c.l.b16 %v132
    %v351 = vunpack.c.h.b16 %v132
    %v352 = vunpack.c.l.b16 %v133
    %v353 = vunpack.c.h.b16 %v133
    %v354 = vunpack.c.l.b16 %v134
    %v355 = vunpack.c.h.b16 %v134
    %v356 = vunpack.c.l.b16 %v135
    %v357 = vunpack.c.h.b16 %v135
    %v358 = vpack.c.b16 %v268, %v262
    %v359 = vpack.c.b16 %v269, %v263
    %v360 = vpack.c.b16 %v270, %v264
    %v361 = vpack.c.b16 %v271, %v265
    %v362 = vpack.c.b16 %v272, %v266
    %v363 = vpack.c.b16 %v273, %v267
    %v364 = vpack.c.b16 %v280, %v274
    %v365 = vpack.c.b16 %v281, %v275
    %v366 = vpack.c.b16 %v282, %v276
    %v367 = vpack.c.b16 %v283, %v277
    %v368 = vpack.c.b16 %v284, %v278
    %v369 = vpack.c.b16 %v285, %v279
    %v370 = vpack.c.b16 %v292, %v286
    %v371 = vpack.c.b16 %v293, %v287
    %v372 = vpack.c.b16 %v294, %v288
    %v373 = vpack.c.b16 %v295, %v289
    %v374 = vpack.c.b16 %v296, %v290
    %v375 = vpack.c.b16 %v297, %v291
    %v376 = vpack.c.b16 %v304, %v298
    %v377 = vpack.c.b16 %v305, %v299
    %v378 = vpack.c.b16 %v306, %v300
    %v379 = vpack.c.b16 %v307, %v301
    %v380 = vpack.c.b16 %v308, %v302
    %v381 = vpack.c.b16 %v309, %v303
    %v382 = vpack.c.b16 %v316, %v310
    %v383 = vpack.c.b16 %v317, %v311
    %v384 = vpack.c.b16 %v318, %v312
    %v385 = vpack.c.b16 %v319, %v313
    %v386 = vpack.c.b16 %v320, %v314
    %v387 = vpack.c.b16 %v321, %v315
    %v388 = vpack.c.b16 %v328, %v322
    %v389 = vpack.c.b16 %v329, %v323
    %v390 = vpack.c.b16 %v330, %v324
    %v391 = vpack.c.b16 %v331, %v325
    %v392 = vpack.c.b16 %v332, %v326
    %v393 = vpack.c.b16 %v333, %v327
    %v394 = vpack.c.b16 %v340, %v334
    %v395 = vpack.c.b16 %v341, %v335
    %v396 = vpack.c.b16 %v342, %v336
    %v397 = vpack.c.b16 %v343, %v337
    %v398 = vpack.c.b16 %v344, %v338
    %v399 = vpack.c.b16 %v345, %v339
    %v400 = vpack.c.b16 %v352, %v346
    %v401 = vpack.c.b16 %v353, %v347
    %v402 = vpack.c.b16 %v354, %v348
    %v403 = vpack.c.b16 %v355, %v349
    %v404 = vpack.c.b16 %v356, %v350
    %v405 = vpack.c.b16 %v357, %v351
    %454 = vmatpush.bf16.msra.mxu0 %v400
    %455 = vmatpush.bf16.msra.mxu0 %v394
    %456 = vmatpush.bf16.msra.mxu0 %v388
    %457 = vmatpush.bf16.msra.mxu0 %v382
    %458 = vmatpush.bf16.msra.mxu0 %v376
    %459 = vmatpush.bf16.msra.mxu0 %v370
    %460 = vmatpush.bf16.msra.mxu0 %v364
    %461 = vmatpush.bf16.msra.mxu0 %v358
    %462 = vmatmul.bf16.gmra.mxu0 %v188
    %v463 = vpop.f32.mrf.mxu0
    %v464 = vadd.f32 0.0, %v463
    %v465 = vpop.f32.mrf.mxu0
    %v466 = vadd.f32 0.0, %v465
    %467 = vmatmul.bf16.gmra.mxu0 %v189
    %v468 = vpop.f32.mrf.mxu0
    %v469 = vadd.f32 0.0, %v468
    %v470 = vpop.f32.mrf.mxu0
    %v471 = vadd.f32 0.0, %v470
    %472 = vmatmul.bf16.gmra.mxu0 %v190
    %v473 = vpop.f32.mrf.mxu0
    %v474 = vadd.f32 0.0, %v473
    %v475 = vpop.f32.mrf.mxu0
    %v476 = vadd.f32 0.0, %v475
    %477 = vmatmul.bf16.gmra.mxu0 %v191
    %v478 = vpop.f32.mrf.mxu0
    %v479 = vadd.f32 0.0, %v478
    %v480 = vpop.f32.mrf.mxu0
    %v481 = vadd.f32 0.0, %v480
    %482 = vmatmul.bf16.gmra.mxu0 %v192
    %v483 = vpop.f32.mrf.mxu0
    %v484 = vadd.f32 0.0, %v483
    %v485 = vpop.f32.mrf.mxu0
    %v486 = vadd.f32 0.0, %v485
    %487 = vmatmul.bf16.gmra.mxu0 %v193
    %v488 = vpop.f32.mrf.mxu0
    %v489 = vadd.f32 0.0, %v488
    %v490 = vpop.f32.mrf.mxu0
    %v491 = vadd.f32 0.0, %v490
    %492 = vmatmul.bf16.gmra.mxu0 %v194
    %v493 = vpop.f32.mrf.mxu0
    %v494 = vadd.f32 0.0, %v493
    %v495 = vpop.f32.mrf.mxu0
    %v496 = vadd.f32 0.0, %v495
    %497 = vmatmul.bf16.gmra.mxu0 %v195
    %v498 = vpop.f32.mrf.mxu0
    %v499 = vadd.f32 0.0, %v498
    %v500 = vpop.f32.mrf.mxu0
    %v501 = vadd.f32 0.0, %v500
    %502 = vmatmul.bf16.gmra.mxu0 %v196
    %v503 = vpop.f32.mrf.mxu0
    %v504 = vadd.f32 0.0, %v503
    %v505 = vpop.f32.mrf.mxu0
    %v506 = vadd.f32 0.0, %v505
    %507 = vmatmul.bf16.gmra.mxu0 %v197
    %v508 = vpop.f32.mrf.mxu0
    %v509 = vadd.f32 0.0, %v508
    %v510 = vpop.f32.mrf.mxu0
    %v511 = vadd.f32 0.0, %v510
    %512 = vmatmul.bf16.gmra.mxu0 %v198
    %v513 = vpop.f32.mrf.mxu0
    %v514 = vadd.f32 0.0, %v513
    %v515 = vpop.f32.mrf.mxu0
    %v516 = vadd.f32 0.0, %v515
    %517 = vmatmul.bf16.gmra.mxu0 %v199
    %v518 = vpop.f32.mrf.mxu0
    %v519 = vadd.f32 0.0, %v518
    %v520 = vpop.f32.mrf.mxu0
    %v521 = vadd.f32 0.0, %v520
    %522 = vmatmul.bf16.gmra.mxu0 %v200
    %v523 = vpop.f32.mrf.mxu0
    %v524 = vadd.f32 0.0, %v523
    %v525 = vpop.f32.mrf.mxu0
    %v526 = vadd.f32 0.0, %v525
    %527 = vdwg.mxu0
    %528 = vmatpush.bf16.msra.mxu0 %v401
    %529 = vmatpush.bf16.msra.mxu0 %v395
    %530 = vmatpush.bf16.msra.mxu0 %v389
    %531 = vmatpush.bf16.msra.mxu0 %v383
    %532 = vmatpush.bf16.msra.mxu0 %v377
    %533 = vmatpush.bf16.msra.mxu0 %v371
    %534 = vmatpush.bf16.msra.mxu0 %v365
    %535 = vmatpush.bf16.msra.mxu0 %v359
    %536 = vmatmul.bf16.gmra.mxu0 %v188
    %v537 = vpop.f32.mrf.mxu0
    %v538 = vadd.f32 0.0, %v537
    %v539 = vpop.f32.mrf.mxu0
    %v540 = vadd.f32 0.0, %v539
    %541 = vmatmul.bf16.gmra.mxu0 %v189
    %v542 = vpop.f32.mrf.mxu0
    %v543 = vadd.f32 0.0, %v542
    %v544 = vpop.f32.mrf.mxu0
    %v545 = vadd.f32 0.0, %v544
    %546 = vmatmul.bf16.gmra.mxu0 %v190
    %v547 = vpop.f32.mrf.mxu0
    %v548 = vadd.f32 0.0, %v547
    %v549 = vpop.f32.mrf.mxu0
    %v550 = vadd.f32 0.0, %v549
    %551 = vmatmul.bf16.gmra.mxu0 %v191
    %v552 = vpop.f32.mrf.mxu0
    %v553 = vadd.f32 0.0, %v552
    %v554 = vpop.f32.mrf.mxu0
    %v555 = vadd.f32 0.0, %v554
    %556 = vmatmul.bf16.gmra.mxu0 %v192
    %v557 = vpop.f32.mrf.mxu0
    %v558 = vadd.f32 0.0, %v557
    %v559 = vpop.f32.mrf.mxu0
    %v560 = vadd.f32 0.0, %v559
    %561 = vmatmul.bf16.gmra.mxu0 %v193
    %v562 = vpop.f32.mrf.mxu0
    %v563 = vadd.f32 0.0, %v562
    %v564 = vpop.f32.mrf.mxu0
    %v565 = vadd.f32 0.0, %v564
    %566 = vmatmul.bf16.gmra.mxu0 %v194
    %v567 = vpop.f32.mrf.mxu0
    %v568 = vadd.f32 0.0, %v567
    %v569 = vpop.f32.mrf.mxu0
    %v570 = vadd.f32 0.0, %v569
    %571 = vmatmul.bf16.gmra.mxu0 %v195
    %v572 = vpop.f32.mrf.mxu0
    %v573 = vadd.f32 0.0, %v572
    %v574 = vpop.f32.mrf.mxu0
    %v575 = vadd.f32 0.0, %v574
    %576 = vmatmul.bf16.gmra.mxu0 %v196
    %v577 = vpop.f32.mrf.mxu0
    %v578 = vadd.f32 0.0, %v577
    %v579 = vpop.f32.mrf.mxu0
    %v580 = vadd.f32 0.0, %v579
    %581 = vmatmul.bf16.gmra.mxu0 %v197
    %v582 = vpop.f32.mrf.mxu0
    %v583 = vadd.f32 0.0, %v582
    %v584 = vpop.f32.mrf.mxu0
    %v585 = vadd.f32 0.0, %v584
    %586 = vmatmul.bf16.gmra.mxu0 %v198
    %v587 = vpop.f32.mrf.mxu0
    %v588 = vadd.f32 0.0, %v587
    %v589 = vpop.f32.mrf.mxu0
    %v590 = vadd.f32 0.0, %v589
    %591 = vmatmul.bf16.gmra.mxu0 %v199
    %v592 = vpop.f32.mrf.mxu0
    %v593 = vadd.f32 0.0, %v592
    %v594 = vpop.f32.mrf.mxu0
    %v595 = vadd.f32 0.0, %v594
    %596 = vmatmul.bf16.gmra.mxu0 %v200
    %v597 = vpop.f32.mrf.mxu0
    %v598 = vadd.f32 0.0, %v597
    %v599 = vpop.f32.mrf.mxu0
    %v600 = vadd.f32 0.0, %v599
    %601 = vdwg.mxu0
    %602 = vmatpush.bf16.msra.mxu0 %v402
    %603 = vmatpush.bf16.msra.mxu0 %v396
    %604 = vmatpush.bf16.msra.mxu0 %v390
    %605 = vmatpush.bf16.msra.mxu0 %v384
    %606 = vmatpush.bf16.msra.mxu0 %v378
    %607 = vmatpush.bf16.msra.mxu0 %v372
    %608 = vmatpush.bf16.msra.mxu0 %v366
    %609 = vmatpush.bf16.msra.mxu0 %v360
    %610 = vmatmul.bf16.gmra.mxu0 %v188
    %v611 = vpop.f32.mrf.mxu0
    %v612 = vadd.f32 0.0, %v611
    %v613 = vpop.f32.mrf.mxu0
    %v614 = vadd.f32 0.0, %v613
    %615 = vmatmul.bf16.gmra.mxu0 %v189
    %v616 = vpop.f32.mrf.mxu0
    %v617 = vadd.f32 0.0, %v616
    %v618 = vpop.f32.mrf.mxu0
    %v619 = vadd.f32 0.0, %v618
    %620 = vmatmul.bf16.gmra.mxu0 %v190
    %v621 = vpop.f32.mrf.mxu0
    %v622 = vadd.f32 0.0, %v621
    %v623 = vpop.f32.mrf.mxu0
    %v624 = vadd.f32 0.0, %v623
    %625 = vmatmul.bf16.gmra.mxu0 %v191
    %v626 = vpop.f32.mrf.mxu0
    %v627 = vadd.f32 0.0, %v626
    %v628 = vpop.f32.mrf.mxu0
    %v629 = vadd.f32 0.0, %v628
    %630 = vmatmul.bf16.gmra.mxu0 %v192
    %v631 = vpop.f32.mrf.mxu0
    %v632 = vadd.f32 0.0, %v631
    %v633 = vpop.f32.mrf.mxu0
    %v634 = vadd.f32 0.0, %v633
    %635 = vmatmul.bf16.gmra.mxu0 %v193
    %v636 = vpop.f32.mrf.mxu0
    %v637 = vadd.f32 0.0, %v636
    %v638 = vpop.f32.mrf.mxu0
    %v639 = vadd.f32 0.0, %v638
    %640 = vmatmul.bf16.gmra.mxu0 %v194
    %v641 = vpop.f32.mrf.mxu0
    %v642 = vadd.f32 0.0, %v641
    %v643 = vpop.f32.mrf.mxu0
    %v644 = vadd.f32 0.0, %v643
    %645 = vmatmul.bf16.gmra.mxu0 %v195
    %v646 = vpop.f32.mrf.mxu0
    %v647 = vadd.f32 0.0, %v646
    %v648 = vpop.f32.mrf.mxu0
    %v649 = vadd.f32 0.0, %v648
    %650 = vmatmul.bf16.gmra.mxu0 %v196
    %v651 = vpop.f32.mrf.mxu0
    %v652 = vadd.f32 0.0, %v651
    %v653 = vpop.f32.mrf.mxu0
    %v654 = vadd.f32 0.0, %v653
    %655 = vmatmul.bf16.gmra.mxu0 %v197
    %v656 = vpop.f32.mrf.mxu0
    %v657 = vadd.f32 0.0, %v656
    %v658 = vpop.f32.mrf.mxu0
    %v659 = vadd.f32 0.0, %v658
    %660 = vmatmul.bf16.gmra.mxu0 %v198
    %v661 = vpop.f32.mrf.mxu0
    %v662 = vadd.f32 0.0, %v661
    %v663 = vpop.f32.mrf.mxu0
    %v664 = vadd.f32 0.0, %v663
    %665 = vmatmul.bf16.gmra.mxu0 %v199
    %v666 = vpop.f32.mrf.mxu0
    %v667 = vadd.f32 0.0, %v666
    %v668 = vpop.f32.mrf.mxu0
    %v669 = vadd.f32 0.0, %v668
    %670 = vmatmul.bf16.gmra.mxu0 %v200
    %v671 = vpop.f32.mrf.mxu0
    %v672 = vadd.f32 0.0, %v671
    %v673 = vpop.f32.mrf.mxu0
    %v674 = vadd.f32 0.0, %v673
    %675 = vdwg.mxu0
    %676 = vmatpush.bf16.msra.mxu0 %v403
    %677 = vmatpush.bf16.msra.mxu0 %v397
    %678 = vmatpush.bf16.msra.mxu0 %v391
    %679 = vmatpush.bf16.msra.mxu0 %v385
    %680 = vmatpush.bf16.msra.mxu0 %v379
    %681 = vmatpush.bf16.msra.mxu0 %v373
    %682 = vmatpush.bf16.msra.mxu0 %v367
    %683 = vmatpush.bf16.msra.mxu0 %v361
    %684 = vmatmul.bf16.gmra.mxu0 %v188
    %v685 = vpop.f32.mrf.mxu0
    %v686 = vadd.f32 0.0, %v685
    %v687 = vpop.f32.mrf.mxu0
    %v688 = vadd.f32 0.0, %v687
    %689 = vmatmul.bf16.gmra.mxu0 %v189
    %v690 = vpop.f32.mrf.mxu0
    %v691 = vadd.f32 0.0, %v690
    %v692 = vpop.f32.mrf.mxu0
    %v693 = vadd.f32 0.0, %v692
    %694 = vmatmul.bf16.gmra.mxu0 %v190
    %v695 = vpop.f32.mrf.mxu0
    %v696 = vadd.f32 0.0, %v695
    %v697 = vpop.f32.mrf.mxu0
    %v698 = vadd.f32 0.0, %v697
    %699 = vmatmul.bf16.gmra.mxu0 %v191
    %v700 = vpop.f32.mrf.mxu0
    %v701 = vadd.f32 0.0, %v700
    %v702 = vpop.f32.mrf.mxu0
    %v703 = vadd.f32 0.0, %v702
    %704 = vmatmul.bf16.gmra.mxu0 %v192
    %v705 = vpop.f32.mrf.mxu0
    %v706 = vadd.f32 0.0, %v705
    %v707 = vpop.f32.mrf.mxu0
    %v708 = vadd.f32 0.0, %v707
    %709 = vmatmul.bf16.gmra.mxu0 %v193
    %v710 = vpop.f32.mrf.mxu0
    %v711 = vadd.f32 0.0, %v710
    %v712 = vpop.f32.mrf.mxu0
    %v713 = vadd.f32 0.0, %v712
    %714 = vmatmul.bf16.gmra.mxu0 %v194
    %v715 = vpop.f32.mrf.mxu0
    %v716 = vadd.f32 0.0, %v715
    %v717 = vpop.f32.mrf.mxu0
    %v718 = vadd.f32 0.0, %v717
    %719 = vmatmul.bf16.gmra.mxu0 %v195
    %v720 = vpop.f32.mrf.mxu0
    %v721 = vadd.f32 0.0, %v720
    %v722 = vpop.f32.mrf.mxu0
    %v723 = vadd.f32 0.0, %v722
    %724 = vmatmul.bf16.gmra.mxu0 %v196
    %v725 = vpop.f32.mrf.mxu0
    %v726 = vadd.f32 0.0, %v725
    %v727 = vpop.f32.mrf.mxu0
    %v728 = vadd.f32 0.0, %v727
    %729 = vmatmul.bf16.gmra.mxu0 %v197
    %v730 = vpop.f32.mrf.mxu0
    %v731 = vadd.f32 0.0, %v730
    %v732 = vpop.f32.mrf.mxu0
    %v733 = vadd.f32 0.0, %v732
    %734 = vmatmul.bf16.gmra.mxu0 %v198
    %v735 = vpop.f32.mrf.mxu0
    %v736 = vadd.f32 0.0, %v735
    %v737 = vpop.f32.mrf.mxu0
    %v738 = vadd.f32 0.0, %v737
    %739 = vmatmul.bf16.gmra.mxu0 %v199
    %v740 = vpop.f32.mrf.mxu0
    %v741 = vadd.f32 0.0, %v740
    %v742 = vpop.f32.mrf.mxu0
    %v743 = vadd.f32 0.0, %v742
    %744 = vmatmul.bf16.gmra.mxu0 %v200
    %v745 = vpop.f32.mrf.mxu0
    %v746 = vadd.f32 0.0, %v745
    %v747 = vpop.f32.mrf.mxu0
    %v748 = vadd.f32 0.0, %v747
    %749 = vdwg.mxu0
    %750 = vmatpush.bf16.msra.mxu0 %v404
    %751 = vmatpush.bf16.msra.mxu0 %v398
    %752 = vmatpush.bf16.msra.mxu0 %v392
    %753 = vmatpush.bf16.msra.mxu0 %v386
    %754 = vmatpush.bf16.msra.mxu0 %v380
    %755 = vmatpush.bf16.msra.mxu0 %v374
    %756 = vmatpush.bf16.msra.mxu0 %v368
    %757 = vmatpush.bf16.msra.mxu0 %v362
    %758 = vmatmul.bf16.gmra.mxu0 %v188
    %v759 = vpop.f32.mrf.mxu0
    %v760 = vadd.f32 0.0, %v759
    %v761 = vpop.f32.mrf.mxu0
    %v762 = vadd.f32 0.0, %v761
    %763 = vmatmul.bf16.gmra.mxu0 %v189
    %v764 = vpop.f32.mrf.mxu0
    %v765 = vadd.f32 0.0, %v764
    %v766 = vpop.f32.mrf.mxu0
    %v767 = vadd.f32 0.0, %v766
    %768 = vmatmul.bf16.gmra.mxu0 %v190
    %v769 = vpop.f32.mrf.mxu0
    %v770 = vadd.f32 0.0, %v769
    %v771 = vpop.f32.mrf.mxu0
    %v772 = vadd.f32 0.0, %v771
    %773 = vmatmul.bf16.gmra.mxu0 %v191
    %v774 = vpop.f32.mrf.mxu0
    %v775 = vadd.f32 0.0, %v774
    %v776 = vpop.f32.mrf.mxu0
    %v777 = vadd.f32 0.0, %v776
    %778 = vmatmul.bf16.gmra.mxu0 %v192
    %v779 = vpop.f32.mrf.mxu0
    %v780 = vadd.f32 0.0, %v779
    %v781 = vpop.f32.mrf.mxu0
    %v782 = vadd.f32 0.0, %v781
    %783 = vmatmul.bf16.gmra.mxu0 %v193
    %v784 = vpop.f32.mrf.mxu0
    %v785 = vadd.f32 0.0, %v784
    %v786 = vpop.f32.mrf.mxu0
    %v787 = vadd.f32 0.0, %v786
    %788 = vmatmul.bf16.gmra.mxu0 %v194
    %v789 = vpop.f32.mrf.mxu0
    %v790 = vadd.f32 0.0, %v789
    %v791 = vpop.f32.mrf.mxu0
    %v792 = vadd.f32 0.0, %v791
    %793 = vmatmul.bf16.gmra.mxu0 %v195
    %v794 = vpop.f32.mrf.mxu0
    %v795 = vadd.f32 0.0, %v794
    %v796 = vpop.f32.mrf.mxu0
    %v797 = vadd.f32 0.0, %v796
    %798 = vmatmul.bf16.gmra.mxu0 %v196
    %v799 = vpop.f32.mrf.mxu0
    %v800 = vadd.f32 0.0, %v799
    %v801 = vpop.f32.mrf.mxu0
    %v802 = vadd.f32 0.0, %v801
    %803 = vmatmul.bf16.gmra.mxu0 %v197
    %v804 = vpop.f32.mrf.mxu0
    %v805 = vadd.f32 0.0, %v804
    %v806 = vpop.f32.mrf.mxu0
    %v807 = vadd.f32 0.0, %v806
    %808 = vmatmul.bf16.gmra.mxu0 %v198
    %v809 = vpop.f32.mrf.mxu0
    %v810 = vadd.f32 0.0, %v809
    %v811 = vpop.f32.mrf.mxu0
    %v812 = vadd.f32 0.0, %v811
    %813 = vmatmul.bf16.gmra.mxu0 %v199
    %v814 = vpop.f32.mrf.mxu0
    %v815 = vadd.f32 0.0, %v814
    %v816 = vpop.f32.mrf.mxu0
    %v817 = vadd.f32 0.0, %v816
    %818 = vmatmul.bf16.gmra.mxu0 %v200
    %v819 = vpop.f32.mrf.mxu0
    %v820 = vadd.f32 0.0, %v819
    %v821 = vpop.f32.mrf.mxu0
    %v822 = vadd.f32 0.0, %v821
    %823 = vdwg.mxu0
    %824 = vmatpush.bf16.msra.mxu0 %v405
    %825 = vmatpush.bf16.msra.mxu0 %v399
    %826 = vmatpush.bf16.msra.mxu0 %v393
    %827 = vmatpush.bf16.msra.mxu0 %v387
    %828 = vmatpush.bf16.msra.mxu0 %v381
    %829 = vmatpush.bf16.msra.mxu0 %v375
    %830 = vmatpush.bf16.msra.mxu0 %v369
    %831 = vmatpush.bf16.msra.mxu0 %v363
    %832 = vmatmul.bf16.gmra.mxu0 %v188
    %v833 = vpop.f32.mrf.mxu0
    %v834 = vadd.f32 0.0, %v833
    %v835 = vpop.f32.mrf.mxu0
    %v836 = vadd.f32 0.0, %v835
    %837 = vmatmul.bf16.gmra.mxu0 %v189
    %v838 = vpop.f32.mrf.mxu0
    %v839 = vadd.f32 0.0, %v838
    %v840 = vpop.f32.mrf.mxu0
    %v841 = vadd.f32 0.0, %v840
    %842 = vmatmul.bf16.gmra.mxu0 %v190
    %v843 = vpop.f32.mrf.mxu0
    %v844 = vadd.f32 0.0, %v843
    %v845 = vpop.f32.mrf.mxu0
    %v846 = vadd.f32 0.0, %v845
    %847 = vmatmul.bf16.gmra.mxu0 %v191
    %v848 = vpop.f32.mrf.mxu0
    %v849 = vadd.f32 0.0, %v848
    %v850 = vpop.f32.mrf.mxu0
    %v851 = vadd.f32 0.0, %v850
    %852 = vmatmul.bf16.gmra.mxu0 %v192
    %v853 = vpop.f32.mrf.mxu0
    %v854 = vadd.f32 0.0, %v853
    %v855 = vpop.f32.mrf.mxu0
    %v856 = vadd.f32 0.0, %v855
    %857 = vmatmul.bf16.gmra.mxu0 %v193
    %v858 = vpop.f32.mrf.mxu0
    %v859 = vadd.f32 0.0, %v858
    %v860 = vpop.f32.mrf.mxu0
    %v861 = vadd.f32 0.0, %v860
    %862 = vmatmul.bf16.gmra.mxu0 %v194
    %v863 = vpop.f32.mrf.mxu0
    %v864 = vadd.f32 0.0, %v863
    %v865 = vpop.f32.mrf.mxu0
    %v866 = vadd.f32 0.0, %v865
    %867 = vmatmul.bf16.gmra.mxu0 %v195
    %v868 = vpop.f32.mrf.mxu0
    %v869 = vadd.f32 0.0, %v868
    %v870 = vpop.f32.mrf.mxu0
    %v871 = vadd.f32 0.0, %v870
    %872 = vmatmul.bf16.gmra.mxu0 %v196
    %v873 = vpop.f32.mrf.mxu0
    %v874 = vadd.f32 0.0, %v873
    %v875 = vpop.f32.mrf.mxu0
    %v876 = vadd.f32 0.0, %v875
    %877 = vmatmul.bf16.gmra.mxu0 %v197
    %v878 = vpop.f32.mrf.mxu0
    %v879 = vadd.f32 0.0, %v878
    %v880 = vpop.f32.mrf.mxu0
    %v881 = vadd.f32 0.0, %v880
    %882 = vmatmul.bf16.gmra.mxu0 %v198
    %v883 = vpop.f32.mrf.mxu0
    %v884 = vadd.f32 0.0, %v883
    %v885 = vpop.f32.mrf.mxu0
    %v886 = vadd.f32 0.0, %v885
    %887 = vmatmul.bf16.gmra.mxu0 %v199
    %v888 = vpop.f32.mrf.mxu0
    %v889 = vadd.f32 0.0, %v888
    %v890 = vpop.f32.mrf.mxu0
    %v891 = vadd.f32 0.0, %v890
    %892 = vmatmul.bf16.gmra.mxu0 %v200
    %v893 = vpop.f32.mrf.mxu0
    %v894 = vadd.f32 0.0, %v893
    %v895 = vpop.f32.mrf.mxu0
    %v896 = vadd.f32 0.0, %v895
    %897 = vdwg.mxu0
    %v898 = vxor.u32 %v464, 2147483648
    %v899 = vxor.u32 %v538, 2147483648
    %v900 = vxor.u32 %v612, 2147483648
    %v901 = vxor.u32 %v466, 2147483648
    %v902 = vxor.u32 %v540, 2147483648
    %v903 = vxor.u32 %v614, 2147483648
    %v904 = vxor.u32 %v469, 2147483648
    %v905 = vxor.u32 %v543, 2147483648
    %v906 = vxor.u32 %v617, 2147483648
    %v907 = vxor.u32 %v471, 2147483648
    %v908 = vxor.u32 %v545, 2147483648
    %v909 = vxor.u32 %v619, 2147483648
    %v910 = vxor.u32 %v474, 2147483648
    %v911 = vxor.u32 %v548, 2147483648
    %v912 = vxor.u32 %v622, 2147483648
    %v913 = vxor.u32 %v476, 2147483648
    %v914 = vxor.u32 %v550, 2147483648
    %v915 = vxor.u32 %v624, 2147483648
    %v916 = vxor.u32 %v479, 2147483648
    %v917 = vxor.u32 %v553, 2147483648
    %v918 = vxor.u32 %v627, 2147483648
    %v919 = vxor.u32 %v481, 2147483648
    %v920 = vxor.u32 %v555, 2147483648
    %v921 = vxor.u32 %v629, 2147483648
    %v922 = vxor.u32 %v484, 2147483648
    %v923 = vxor.u32 %v558, 2147483648
    %v924 = vxor.u32 %v632, 2147483648
    %v925 = vxor.u32 %v486, 2147483648
    %v926 = vxor.u32 %v560, 2147483648
    %v927 = vxor.u32 %v634, 2147483648
    %v928 = vxor.u32 %v489, 2147483648
    %v929 = vxor.u32 %v563, 2147483648
    %v930 = vxor.u32 %v637, 2147483648
    %v931 = vxor.u32 %v491, 2147483648
    %v932 = vxor.u32 %v565, 2147483648
    %v933 = vxor.u32 %v639, 2147483648
    %v934 = vxor.u32 %v494, 2147483648
    %v935 = vxor.u32 %v568, 2147483648
    %v936 = vxor.u32 %v642, 2147483648
    %v937 = vxor.u32 %v496, 2147483648
    %v938 = vxor.u32 %v570, 2147483648
    %v939 = vxor.u32 %v644, 2147483648
    %v940 = vxor.u32 %v499, 2147483648
    %v941 = vxor.u32 %v573, 2147483648
    %v942 = vxor.u32 %v647, 2147483648
    %v943 = vxor.u32 %v501, 2147483648
    %v944 = vxor.u32 %v575, 2147483648
    %v945 = vxor.u32 %v649, 2147483648
    %v946 = vxor.u32 %v504, 2147483648
    %v947 = vxor.u32 %v578, 2147483648
    %v948 = vxor.u32 %v652, 2147483648
    %v949 = vxor.u32 %v506, 2147483648
    %v950 = vxor.u32 %v580, 2147483648
    %v951 = vxor.u32 %v654, 2147483648
    %v952 = vxor.u32 %v509, 2147483648
    %v953 = vxor.u32 %v583, 2147483648
    %v954 = vxor.u32 %v657, 2147483648
    %v955 = vxor.u32 %v511, 2147483648
    %v956 = vxor.u32 %v585, 2147483648
    %v957 = vxor.u32 %v659, 2147483648
    %v958 = vxor.u32 %v514, 2147483648
    %v959 = vxor.u32 %v588, 2147483648
    %v960 = vxor.u32 %v662, 2147483648
    %v961 = vxor.u32 %v516, 2147483648
    %v962 = vxor.u32 %v590, 2147483648
    %v963 = vxor.u32 %v664, 2147483648
    %v964 = vxor.u32 %v519, 2147483648
    %v965 = vxor.u32 %v593, 2147483648
    %v966 = vxor.u32 %v667, 2147483648
    %v967 = vxor.u32 %v521, 2147483648
    %v968 = vxor.u32 %v595, 2147483648
    %v969 = vxor.u32 %v669, 2147483648
    %v970 = vxor.u32 %v524, 2147483648
    %v971 = vxor.u32 %v598, 2147483648
    %v972 = vxor.u32 %v672, 2147483648
    %v973 = vxor.u32 %v526, 2147483648
    %v974 = vxor.u32 %v600, 2147483648
    %v975 = vxor.u32 %v674, 2147483648
    %v976 = vmul.f32 %v898, 1.442695
    %v977 = vpow.pop %v976
    %v978 = vmul.f32 %v899, 1.442695
    %v979 = vpow.pop %v978
    %v980 = vmul.f32 %v900, 1.442695
    %v981 = vpow.pop %v980
    %v982 = vmul.f32 %v901, 1.442695
    %v983 = vpow.pop %v982
    %v984 = vmul.f32 %v902, 1.442695
    %v985 = vpow.pop %v984
    %v986 = vmul.f32 %v903, 1.442695
    %v987 = vpow.pop %v986
    %v988 = vmul.f32 %v904, 1.442695
    %v989 = vpow.pop %v988
    %v990 = vmul.f32 %v905, 1.442695
    %v991 = vpow.pop %v990
    %v992 = vmul.f32 %v906, 1.442695
    %v993 = vpow.pop %v992
    %v994 = vmul.f32 %v907, 1.442695
    %v995 = vpow.pop %v994
    %v996 = vmul.f32 %v908, 1.442695
    %v997 = vpow.pop %v996
    %v998 = vmul.f32 %v909, 1.442695
    %v999 = vpow.pop %v998
    %v1000 = vmul.f32 %v910, 1.442695
    %v1001 = vpow.pop %v1000
    %v1002 = vmul.f32 %v911, 1.442695
    %v1003 = vpow.pop %v1002
    %v1004 = vmul.f32 %v912, 1.442695
    %v1005 = vpow.pop %v1004
    %v1006 = vmul.f32 %v913, 1.442695
    %v1007 = vpow.pop %v1006
    %v1008 = vmul.f32 %v914, 1.442695
    %v1009 = vpow.pop %v1008
    %v1010 = vmul.f32 %v915, 1.442695
    %v1011 = vpow.pop %v1010
    %v1012 = vmul.f32 %v916, 1.442695
    %v1013 = vpow.pop %v1012
    %v1014 = vmul.f32 %v917, 1.442695
    %v1015 = vpow.pop %v1014
    %v1016 = vmul.f32 %v918, 1.442695
    %v1017 = vpow.pop %v1016
    %v1018 = vmul.f32 %v919, 1.442695
    %v1019 = vpow.pop %v1018
    %v1020 = vmul.f32 %v920, 1.442695
    %v1021 = vpow.pop %v1020
    %v1022 = vmul.f32 %v921, 1.442695
    %v1023 = vpow.pop %v1022
    %v1024 = vmul.f32 %v922, 1.442695
    %v1025 = vpow.pop %v1024
    %v1026 = vmul.f32 %v923, 1.442695
    %v1027 = vpow.pop %v1026
    %v1028 = vmul.f32 %v924, 1.442695
    %v1029 = vpow.pop %v1028
    %v1030 = vmul.f32 %v925, 1.442695
    %v1031 = vpow.pop %v1030
    %v1032 = vmul.f32 %v926, 1.442695
    %v1033 = vpow.pop %v1032
    %v1034 = vmul.f32 %v927, 1.442695
    %v1035 = vpow.pop %v1034
    %v1036 = vmul.f32 %v928, 1.442695
    %v1037 = vpow.pop %v1036
    %v1038 = vmul.f32 %v929, 1.442695
    %v1039 = vpow.pop %v1038
    %v1040 = vmul.f32 %v930, 1.442695
    %v1041 = vpow.pop %v1040
    %v1042 = vmul.f32 %v931, 1.442695
    %v1043 = vpow.pop %v1042
    %v1044 = vmul.f32 %v932, 1.442695
    %v1045 = vpow.pop %v1044
    %v1046 = vmul.f32 %v933, 1.442695
    %v1047 = vpow.pop %v1046
    %v1048 = vmul.f32 %v934, 1.442695
    %v1049 = vpow.pop %v1048
    %v1050 = vmul.f32 %v935, 1.442695
    %v1051 = vpow.pop %v1050
    %v1052 = vmul.f32 %v936, 1.442695
    %v1053 = vpow.pop %v1052
    %v1054 = vmul.f32 %v937, 1.442695
    %v1055 = vpow.pop %v1054
    %v1056 = vmul.f32 %v938, 1.442695
    %v1057 = vpow.pop %v1056
    %v1058 = vmul.f32 %v939, 1.442695
    %v1059 = vpow.pop %v1058
    %v1060 = vmul.f32 %v940, 1.442695
    %v1061 = vpow.pop %v1060
    %v1062 = vmul.f32 %v941, 1.442695
    %v1063 = vpow.pop %v1062
    %v1064 = vmul.f32 %v942, 1.442695
    %v1065 = vpow.pop %v1064
    %v1066 = vmul.f32 %v943, 1.442695
    %v1067 = vpow.pop %v1066
    %v1068 = vmul.f32 %v944, 1.442695
    %v1069 = vpow.pop %v1068
    %v1070 = vmul.f32 %v945, 1.442695
    %v1071 = vpow.pop %v1070
    %v1072 = vmul.f32 %v946, 1.442695
    %v1073 = vpow.pop %v1072
    %v1074 = vmul.f32 %v947, 1.442695
    %v1075 = vpow.pop %v1074
    %v1076 = vmul.f32 %v948, 1.442695
    %v1077 = vpow.pop %v1076
    %v1078 = vmul.f32 %v949, 1.442695
    %v1079 = vpow.pop %v1078
    %v1080 = vmul.f32 %v950, 1.442695
    %v1081 = vpow.pop %v1080
    %v1082 = vmul.f32 %v951, 1.442695
    %v1083 = vpow.pop %v1082
    %v1084 = vmul.f32 %v952, 1.442695
    %v1085 = vpow.pop %v1084
    %v1086 = vmul.f32 %v953, 1.442695
    %v1087 = vpow.pop %v1086
    %v1088 = vmul.f32 %v954, 1.442695
    %v1089 = vpow.pop %v1088
    %v1090 = vmul.f32 %v955, 1.442695
    %v1091 = vpow.pop %v1090
    %v1092 = vmul.f32 %v956, 1.442695
    %v1093 = vpow.pop %v1092
    %v1094 = vmul.f32 %v957, 1.442695
    %v1095 = vpow.pop %v1094
    %v1096 = vmul.f32 %v958, 1.442695
    %v1097 = vpow.pop %v1096
    %v1098 = vmul.f32 %v959, 1.442695
    %v1099 = vpow.pop %v1098
    %v1100 = vmul.f32 %v960, 1.442695
    %v1101 = vpow.pop %v1100
    %v1102 = vmul.f32 %v961, 1.442695
    %v1103 = vpow.pop %v1102
    %v1104 = vmul.f32 %v962, 1.442695
    %v1105 = vpow.pop %v1104
    %v1106 = vmul.f32 %v963, 1.442695
    %v1107 = vpow.pop %v1106
    %v1108 = vmul.f32 %v964, 1.442695
    %v1109 = vpow.pop %v1108
    %v1110 = vmul.f32 %v965, 1.442695
    %v1111 = vpow.pop %v1110
    %v1112 = vmul.f32 %v966, 1.442695
    %v1113 = vpow.pop %v1112
    %v1114 = vmul.f32 %v967, 1.442695
    %v1115 = vpow.pop %v1114
    %v1116 = vmul.f32 %v968, 1.442695
    %v1117 = vpow.pop %v1116
    %v1118 = vmul.f32 %v969, 1.442695
    %v1119 = vpow.pop %v1118
    %v1120 = vmul.f32 %v970, 1.442695
    %v1121 = vpow.pop %v1120
    %v1122 = vmul.f32 %v971, 1.442695
    %v1123 = vpow.pop %v1122
    %v1124 = vmul.f32 %v972, 1.442695
    %v1125 = vpow.pop %v1124
    %v1126 = vmul.f32 %v973, 1.442695
    %v1127 = vpow.pop %v1126
    %v1128 = vmul.f32 %v974, 1.442695
    %v1129 = vpow.pop %v1128
    %v1130 = vmul.f32 %v975, 1.442695
    %v1131 = vpow.pop %v1130
    %v1132 = vadd.f32 %v977, 1.0
    %v1133 = vadd.f32 %v979, 1.0
    %v1134 = vadd.f32 %v981, 1.0
    %v1135 = vadd.f32 %v983, 1.0
    %v1136 = vadd.f32 %v985, 1.0
    %v1137 = vadd.f32 %v987, 1.0
    %v1138 = vadd.f32 %v989, 1.0
    %v1139 = vadd.f32 %v991, 1.0
    %v1140 = vadd.f32 %v993, 1.0
    %v1141 = vadd.f32 %v995, 1.0
    %v1142 = vadd.f32 %v997, 1.0
    %v1143 = vadd.f32 %v999, 1.0
    %v1144 = vadd.f32 %v1001, 1.0
    %v1145 = vadd.f32 %v1003, 1.0
    %v1146 = vadd.f32 %v1005, 1.0
    %v1147 = vadd.f32 %v1007, 1.0
    %v1148 = vadd.f32 %v1009, 1.0
    %v1149 = vadd.f32 %v1011, 1.0
    %v1150 = vadd.f32 %v1013, 1.0
    %v1151 = vadd.f32 %v1015, 1.0
    %v1152 = vadd.f32 %v1017, 1.0
    %v1153 = vadd.f32 %v1019, 1.0
    %v1154 = vadd.f32 %v1021, 1.0
    %v1155 = vadd.f32 %v1023, 1.0
    %v1156 = vadd.f32 %v1025, 1.0
    %v1157 = vadd.f32 %v1027, 1.0
    %v1158 = vadd.f32 %v1029, 1.0
    %v1159 = vadd.f32 %v1031, 1.0
    %v1160 = vadd.f32 %v1033, 1.0
    %v1161 = vadd.f32 %v1035, 1.0
    %v1162 = vadd.f32 %v1037, 1.0
    %v1163 = vadd.f32 %v1039, 1.0
    %v1164 = vadd.f32 %v1041, 1.0
    %v1165 = vadd.f32 %v1043, 1.0
    %v1166 = vadd.f32 %v1045, 1.0
    %v1167 = vadd.f32 %v1047, 1.0
    %v1168 = vadd.f32 %v1049, 1.0
    %v1169 = vadd.f32 %v1051, 1.0
    %v1170 = vadd.f32 %v1053, 1.0
    %v1171 = vadd.f32 %v1055, 1.0
    %v1172 = vadd.f32 %v1057, 1.0
    %v1173 = vadd.f32 %v1059, 1.0
    %v1174 = vadd.f32 %v1061, 1.0
    %v1175 = vadd.f32 %v1063, 1.0
    %v1176 = vadd.f32 %v1065, 1.0
    %v1177 = vadd.f32 %v1067, 1.0
    %v1178 = vadd.f32 %v1069, 1.0
    %v1179 = vadd.f32 %v1071, 1.0
    %v1180 = vadd.f32 %v1073, 1.0
    %v1181 = vadd.f32 %v1075, 1.0
    %v1182 = vadd.f32 %v1077, 1.0
    %v1183 = vadd.f32 %v1079, 1.0
    %v1184 = vadd.f32 %v1081, 1.0
    %v1185 = vadd.f32 %v1083, 1.0
    %v1186 = vadd.f32 %v1085, 1.0
    %v1187 = vadd.f32 %v1087, 1.0
    %v1188 = vadd.f32 %v1089, 1.0
    %v1189 = vadd.f32 %v1091, 1.0
    %v1190 = vadd.f32 %v1093, 1.0
    %v1191 = vadd.f32 %v1095, 1.0
    %v1192 = vadd.f32 %v1097, 1.0
    %v1193 = vadd.f32 %v1099, 1.0
    %v1194 = vadd.f32 %v1101, 1.0
    %v1195 = vadd.f32 %v1103, 1.0
    %v1196 = vadd.f32 %v1105, 1.0
    %v1197 = vadd.f32 %v1107, 1.0
    %v1198 = vadd.f32 %v1109, 1.0
    %v1199 = vadd.f32 %v1111, 1.0
    %v1200 = vadd.f32 %v1113, 1.0
    %v1201 = vadd.f32 %v1115, 1.0
    %v1202 = vadd.f32 %v1117, 1.0
    %v1203 = vadd.f32 %v1119, 1.0
    %v1204 = vadd.f32 %v1121, 1.0
    %v1205 = vadd.f32 %v1123, 1.0
    %v1206 = vadd.f32 %v1125, 1.0
    %v1207 = vadd.f32 %v1127, 1.0
    %v1208 = vadd.f32 %v1129, 1.0
    %v1209 = vadd.f32 %v1131, 1.0
    %v1210 = vrcp.pop %v1132
    %v1211 = vmul.f32 %v1132, %v1210
    %v1212 = vsub.f32 1.0, %v1211
    %v1213 = vmul.f32 %v1210, %v1212
    %v1214 = vadd.f32 %v1210, %v1213
    %vm1215 = vweird.f32 %v1132
    %vm1216 = vweird.f32 %v1210
    %vm1217 = vmor %vm1215, %vm1216
    %v1218 = vsel %vm1217, %v1210, %v1214
    %v1219 = vand.u32 2147483647, %v1132
    %vm1220 = vcmp.eq.f32.partialorder %v1219, 8.507059e+37
    %v1221 = vand.u32 %v1132, 2147483648
    %v1222 = vor.u32 1.1754944e-38, %v1221
    %v1223 = vsel %vm1220, %v1222, %v1218
    %v1224 = vmul.f32 1.0, %v1223
    %v1225 = vrcp.pop %v1133
    %v1226 = vmul.f32 %v1133, %v1225
    %v1227 = vsub.f32 1.0, %v1226
    %v1228 = vmul.f32 %v1225, %v1227
    %v1229 = vadd.f32 %v1225, %v1228
    %vm1230 = vweird.f32 %v1133
    %vm1231 = vweird.f32 %v1225
    %vm1232 = vmor %vm1230, %vm1231
    %v1233 = vsel %vm1232, %v1225, %v1229
    %v1234 = vand.u32 2147483647, %v1133
    %vm1235 = vcmp.eq.f32.partialorder %v1234, 8.507059e+37
    %v1236 = vand.u32 %v1133, 2147483648
    %v1237 = vor.u32 1.1754944e-38, %v1236
    %v1238 = vsel %vm1235, %v1237, %v1233
    %v1239 = vmul.f32 1.0, %v1238
    %v1240 = vrcp.pop %v1134
    %v1241 = vmul.f32 %v1134, %v1240
    %v1242 = vsub.f32 1.0, %v1241
    %v1243 = vmul.f32 %v1240, %v1242
    %v1244 = vadd.f32 %v1240, %v1243
    %vm1245 = vweird.f32 %v1134
    %vm1246 = vweird.f32 %v1240
    %vm1247 = vmor %vm1245, %vm1246
    %v1248 = vsel %vm1247, %v1240, %v1244
    %v1249 = vand.u32 2147483647, %v1134
    %vm1250 = vcmp.eq.f32.partialorder %v1249, 8.507059e+37
    %v1251 = vand.u32 %v1134, 2147483648
    %v1252 = vor.u32 1.1754944e-38, %v1251
    %v1253 = vsel %vm1250, %v1252, %v1248
    %v1254 = vmul.f32 1.0, %v1253
    %v1255 = vrcp.pop %v1135
    %v1256 = vmul.f32 %v1135, %v1255
    %v1257 = vsub.f32 1.0, %v1256
    %v1258 = vmul.f32 %v1255, %v1257
    %v1259 = vadd.f32 %v1255, %v1258
    %vm1260 = vweird.f32 %v1135
    %vm1261 = vweird.f32 %v1255
    %vm1262 = vmor %vm1260, %vm1261
    %v1263 = vsel %vm1262, %v1255, %v1259
    %v1264 = vand.u32 2147483647, %v1135
    %vm1265 = vcmp.eq.f32.partialorder %v1264, 8.507059e+37
    %v1266 = vand.u32 %v1135, 2147483648
    %v1267 = vor.u32 1.1754944e-38, %v1266
    %v1268 = vsel %vm1265, %v1267, %v1263
    %v1269 = vmul.f32 1.0, %v1268
    %v1270 = vrcp.pop %v1136
    %v1271 = vmul.f32 %v1136, %v1270
    %v1272 = vsub.f32 1.0, %v1271
    %v1273 = vmul.f32 %v1270, %v1272
    %v1274 = vadd.f32 %v1270, %v1273
    %vm1275 = vweird.f32 %v1136
    %vm1276 = vweird.f32 %v1270
    %vm1277 = vmor %vm1275, %vm1276
    %v1278 = vsel %vm1277, %v1270, %v1274
    %v1279 = vand.u32 2147483647, %v1136
    %vm1280 = vcmp.eq.f32.partialorder %v1279, 8.507059e+37
    %v1281 = vand.u32 %v1136, 2147483648
    %v1282 = vor.u32 1.1754944e-38, %v1281
    %v1283 = vsel %vm1280, %v1282, %v1278
    %v1284 = vmul.f32 1.0, %v1283
    %v1285 = vrcp.pop %v1137
    %v1286 = vmul.f32 %v1137, %v1285
    %v1287 = vsub.f32 1.0, %v1286
    %v1288 = vmul.f32 %v1285, %v1287
    %v1289 = vadd.f32 %v1285, %v1288
    %vm1290 = vweird.f32 %v1137
    %vm1291 = vweird.f32 %v1285
    %vm1292 = vmor %vm1290, %vm1291
    %v1293 = vsel %vm1292, %v1285, %v1289
    %v1294 = vand.u32 2147483647, %v1137
    %vm1295 = vcmp.eq.f32.partialorder %v1294, 8.507059e+37
    %v1296 = vand.u32 %v1137, 2147483648
    %v1297 = vor.u32 1.1754944e-38, %v1296
    %v1298 = vsel %vm1295, %v1297, %v1293
    %v1299 = vmul.f32 1.0, %v1298
    %v1300 = vrcp.pop %v1138
    %v1301 = vmul.f32 %v1138, %v1300
    %v1302 = vsub.f32 1.0, %v1301
    %v1303 = vmul.f32 %v1300, %v1302
    %v1304 = vadd.f32 %v1300, %v1303
    %vm1305 = vweird.f32 %v1138
    %vm1306 = vweird.f32 %v1300
    %vm1307 = vmor %vm1305, %vm1306
    %v1308 = vsel %vm1307, %v1300, %v1304
    %v1309 = vand.u32 2147483647, %v1138
    %vm1310 = vcmp.eq.f32.partialorder %v1309, 8.507059e+37
    %v1311 = vand.u32 %v1138, 2147483648
    %v1312 = vor.u32 1.1754944e-38, %v1311
    %v1313 = vsel %vm1310, %v1312, %v1308
    %v1314 = vmul.f32 1.0, %v1313
    %v1315 = vrcp.pop %v1139
    %v1316 = vmul.f32 %v1139, %v1315
    %v1317 = vsub.f32 1.0, %v1316
    %v1318 = vmul.f32 %v1315, %v1317
    %v1319 = vadd.f32 %v1315, %v1318
    %vm1320 = vweird.f32 %v1139
    %vm1321 = vweird.f32 %v1315
    %vm1322 = vmor %vm1320, %vm1321
    %v1323 = vsel %vm1322, %v1315, %v1319
    %v1324 = vand.u32 2147483647, %v1139
    %vm1325 = vcmp.eq.f32.partialorder %v1324, 8.507059e+37
    %v1326 = vand.u32 %v1139, 2147483648
    %v1327 = vor.u32 1.1754944e-38, %v1326
    %v1328 = vsel %vm1325, %v1327, %v1323
    %v1329 = vmul.f32 1.0, %v1328
    %v1330 = vrcp.pop %v1140
    %v1331 = vmul.f32 %v1140, %v1330
    %v1332 = vsub.f32 1.0, %v1331
    %v1333 = vmul.f32 %v1330, %v1332
    %v1334 = vadd.f32 %v1330, %v1333
    %vm1335 = vweird.f32 %v1140
    %vm1336 = vweird.f32 %v1330
    %vm1337 = vmor %vm1335, %vm1336
    %v1338 = vsel %vm1337, %v1330, %v1334
    %v1339 = vand.u32 2147483647, %v1140
    %vm1340 = vcmp.eq.f32.partialorder %v1339, 8.507059e+37
    %v1341 = vand.u32 %v1140, 2147483648
    %v1342 = vor.u32 1.1754944e-38, %v1341
    %v1343 = vsel %vm1340, %v1342, %v1338
    %v1344 = vmul.f32 1.0, %v1343
    %v1345 = vrcp.pop %v1141
    %v1346 = vmul.f32 %v1141, %v1345
    %v1347 = vsub.f32 1.0, %v1346
    %v1348 = vmul.f32 %v1345, %v1347
    %v1349 = vadd.f32 %v1345, %v1348
    %vm1350 = vweird.f32 %v1141
    %vm1351 = vweird.f32 %v1345
    %vm1352 = vmor %vm1350, %vm1351
    %v1353 = vsel %vm1352, %v1345, %v1349
    %v1354 = vand.u32 2147483647, %v1141
    %vm1355 = vcmp.eq.f32.partialorder %v1354, 8.507059e+37
    %v1356 = vand.u32 %v1141, 2147483648
    %v1357 = vor.u32 1.1754944e-38, %v1356
    %v1358 = vsel %vm1355, %v1357, %v1353
    %v1359 = vmul.f32 1.0, %v1358
    %v1360 = vrcp.pop %v1142
    %v1361 = vmul.f32 %v1142, %v1360
    %v1362 = vsub.f32 1.0, %v1361
    %v1363 = vmul.f32 %v1360, %v1362
    %v1364 = vadd.f32 %v1360, %v1363
    %vm1365 = vweird.f32 %v1142
    %vm1366 = vweird.f32 %v1360
    %vm1367 = vmor %vm1365, %vm1366
    %v1368 = vsel %vm1367, %v1360, %v1364
    %v1369 = vand.u32 2147483647, %v1142
    %vm1370 = vcmp.eq.f32.partialorder %v1369, 8.507059e+37
    %v1371 = vand.u32 %v1142, 2147483648
    %v1372 = vor.u32 1.1754944e-38, %v1371
    %v1373 = vsel %vm1370, %v1372, %v1368
    %v1374 = vmul.f32 1.0, %v1373
    %v1375 = vrcp.pop %v1143
    %v1376 = vmul.f32 %v1143, %v1375
    %v1377 = vsub.f32 1.0, %v1376
    %v1378 = vmul.f32 %v1375, %v1377
    %v1379 = vadd.f32 %v1375, %v1378
    %vm1380 = vweird.f32 %v1143
    %vm1381 = vweird.f32 %v1375
    %vm1382 = vmor %vm1380, %vm1381
    %v1383 = vsel %vm1382, %v1375, %v1379
    %v1384 = vand.u32 2147483647, %v1143
    %vm1385 = vcmp.eq.f32.partialorder %v1384, 8.507059e+37
    %v1386 = vand.u32 %v1143, 2147483648
    %v1387 = vor.u32 1.1754944e-38, %v1386
    %v1388 = vsel %vm1385, %v1387, %v1383
    %v1389 = vmul.f32 1.0, %v1388
    %v1390 = vrcp.pop %v1144
    %v1391 = vmul.f32 %v1144, %v1390
    %v1392 = vsub.f32 1.0, %v1391
    %v1393 = vmul.f32 %v1390, %v1392
    %v1394 = vadd.f32 %v1390, %v1393
    %vm1395 = vweird.f32 %v1144
    %vm1396 = vweird.f32 %v1390
    %vm1397 = vmor %vm1395, %vm1396
    %v1398 = vsel %vm1397, %v1390, %v1394
    %v1399 = vand.u32 2147483647, %v1144
    %vm1400 = vcmp.eq.f32.partialorder %v1399, 8.507059e+37
    %v1401 = vand.u32 %v1144, 2147483648
    %v1402 = vor.u32 1.1754944e-38, %v1401
    %v1403 = vsel %vm1400, %v1402, %v1398
    %v1404 = vmul.f32 1.0, %v1403
    %v1405 = vrcp.pop %v1145
    %v1406 = vmul.f32 %v1145, %v1405
    %v1407 = vsub.f32 1.0, %v1406
    %v1408 = vmul.f32 %v1405, %v1407
    %v1409 = vadd.f32 %v1405, %v1408
    %vm1410 = vweird.f32 %v1145
    %vm1411 = vweird.f32 %v1405
    %vm1412 = vmor %vm1410, %vm1411
    %v1413 = vsel %vm1412, %v1405, %v1409
    %v1414 = vand.u32 2147483647, %v1145
    %vm1415 = vcmp.eq.f32.partialorder %v1414, 8.507059e+37
    %v1416 = vand.u32 %v1145, 2147483648
    %v1417 = vor.u32 1.1754944e-38, %v1416
    %v1418 = vsel %vm1415, %v1417, %v1413
    %v1419 = vmul.f32 1.0, %v1418
    %v1420 = vrcp.pop %v1146
    %v1421 = vmul.f32 %v1146, %v1420
    %v1422 = vsub.f32 1.0, %v1421
    %v1423 = vmul.f32 %v1420, %v1422
    %v1424 = vadd.f32 %v1420, %v1423
    %vm1425 = vweird.f32 %v1146
    %vm1426 = vweird.f32 %v1420
    %vm1427 = vmor %vm1425, %vm1426
    %v1428 = vsel %vm1427, %v1420, %v1424
    %v1429 = vand.u32 2147483647, %v1146
    %vm1430 = vcmp.eq.f32.partialorder %v1429, 8.507059e+37
    %v1431 = vand.u32 %v1146, 2147483648
    %v1432 = vor.u32 1.1754944e-38, %v1431
    %v1433 = vsel %vm1430, %v1432, %v1428
    %v1434 = vmul.f32 1.0, %v1433
    %v1435 = vrcp.pop %v1147
    %v1436 = vmul.f32 %v1147, %v1435
    %v1437 = vsub.f32 1.0, %v1436
    %v1438 = vmul.f32 %v1435, %v1437
    %v1439 = vadd.f32 %v1435, %v1438
    %vm1440 = vweird.f32 %v1147
    %vm1441 = vweird.f32 %v1435
    %vm1442 = vmor %vm1440, %vm1441
    %v1443 = vsel %vm1442, %v1435, %v1439
    %v1444 = vand.u32 2147483647, %v1147
    %vm1445 = vcmp.eq.f32.partialorder %v1444, 8.507059e+37
    %v1446 = vand.u32 %v1147, 2147483648
    %v1447 = vor.u32 1.1754944e-38, %v1446
    %v1448 = vsel %vm1445, %v1447, %v1443
    %v1449 = vmul.f32 1.0, %v1448
    %v1450 = vrcp.pop %v1148
    %v1451 = vmul.f32 %v1148, %v1450
    %v1452 = vsub.f32 1.0, %v1451
    %v1453 = vmul.f32 %v1450, %v1452
    %v1454 = vadd.f32 %v1450, %v1453
    %vm1455 = vweird.f32 %v1148
    %vm1456 = vweird.f32 %v1450
    %vm1457 = vmor %vm1455, %vm1456
    %v1458 = vsel %vm1457, %v1450, %v1454
    %v1459 = vand.u32 2147483647, %v1148
    %vm1460 = vcmp.eq.f32.partialorder %v1459, 8.507059e+37
    %v1461 = vand.u32 %v1148, 2147483648
    %v1462 = vor.u32 1.1754944e-38, %v1461
    %v1463 = vsel %vm1460, %v1462, %v1458
    %v1464 = vmul.f32 1.0, %v1463
    %v1465 = vrcp.pop %v1149
    %v1466 = vmul.f32 %v1149, %v1465
    %v1467 = vsub.f32 1.0, %v1466
    %v1468 = vmul.f32 %v1465, %v1467
    %v1469 = vadd.f32 %v1465, %v1468
    %vm1470 = vweird.f32 %v1149
    %vm1471 = vweird.f32 %v1465
    %vm1472 = vmor %vm1470, %vm1471
    %v1473 = vsel %vm1472, %v1465, %v1469
    %v1474 = vand.u32 2147483647, %v1149
    %vm1475 = vcmp.eq.f32.partialorder %v1474, 8.507059e+37
    %v1476 = vand.u32 %v1149, 2147483648
    %v1477 = vor.u32 1.1754944e-38, %v1476
    %v1478 = vsel %vm1475, %v1477, %v1473
    %v1479 = vmul.f32 1.0, %v1478
    %v1480 = vrcp.pop %v1150
    %v1481 = vmul.f32 %v1150, %v1480
    %v1482 = vsub.f32 1.0, %v1481
    %v1483 = vmul.f32 %v1480, %v1482
    %v1484 = vadd.f32 %v1480, %v1483
    %vm1485 = vweird.f32 %v1150
    %vm1486 = vweird.f32 %v1480
    %vm1487 = vmor %vm1485, %vm1486
    %v1488 = vsel %vm1487, %v1480, %v1484
    %v1489 = vand.u32 2147483647, %v1150
    %vm1490 = vcmp.eq.f32.partialorder %v1489, 8.507059e+37
    %v1491 = vand.u32 %v1150, 2147483648
    %v1492 = vor.u32 1.1754944e-38, %v1491
    %v1493 = vsel %vm1490, %v1492, %v1488
    %v1494 = vmul.f32 1.0, %v1493
    %v1495 = vrcp.pop %v1151
    %v1496 = vmul.f32 %v1151, %v1495
    %v1497 = vsub.f32 1.0, %v1496
    %v1498 = vmul.f32 %v1495, %v1497
    %v1499 = vadd.f32 %v1495, %v1498
    %vm1500 = vweird.f32 %v1151
    %vm1501 = vweird.f32 %v1495
    %vm1502 = vmor %vm1500, %vm1501
    %v1503 = vsel %vm1502, %v1495, %v1499
    %v1504 = vand.u32 2147483647, %v1151
    %vm1505 = vcmp.eq.f32.partialorder %v1504, 8.507059e+37
    %v1506 = vand.u32 %v1151, 2147483648
    %v1507 = vor.u32 1.1754944e-38, %v1506
    %v1508 = vsel %vm1505, %v1507, %v1503
    %v1509 = vmul.f32 1.0, %v1508
    %v1510 = vrcp.pop %v1152
    %v1511 = vmul.f32 %v1152, %v1510
    %v1512 = vsub.f32 1.0, %v1511
    %v1513 = vmul.f32 %v1510, %v1512
    %v1514 = vadd.f32 %v1510, %v1513
    %vm1515 = vweird.f32 %v1152
    %vm1516 = vweird.f32 %v1510
    %vm1517 = vmor %vm1515, %vm1516
    %v1518 = vsel %vm1517, %v1510, %v1514
    %v1519 = vand.u32 2147483647, %v1152
    %vm1520 = vcmp.eq.f32.partialorder %v1519, 8.507059e+37
    %v1521 = vand.u32 %v1152, 2147483648
    %v1522 = vor.u32 1.1754944e-38, %v1521
    %v1523 = vsel %vm1520, %v1522, %v1518
    %v1524 = vmul.f32 1.0, %v1523
    %v1525 = vrcp.pop %v1153
    %v1526 = vmul.f32 %v1153, %v1525
    %v1527 = vsub.f32 1.0, %v1526
    %v1528 = vmul.f32 %v1525, %v1527
    %v1529 = vadd.f32 %v1525, %v1528
    %vm1530 = vweird.f32 %v1153
    %vm1531 = vweird.f32 %v1525
    %vm1532 = vmor %vm1530, %vm1531
    %v1533 = vsel %vm1532, %v1525, %v1529
    %v1534 = vand.u32 2147483647, %v1153
    %vm1535 = vcmp.eq.f32.partialorder %v1534, 8.507059e+37
    %v1536 = vand.u32 %v1153, 2147483648
    %v1537 = vor.u32 1.1754944e-38, %v1536
    %v1538 = vsel %vm1535, %v1537, %v1533
    %v1539 = vmul.f32 1.0, %v1538
    %v1540 = vrcp.pop %v1154
    %v1541 = vmul.f32 %v1154, %v1540
    %v1542 = vsub.f32 1.0, %v1541
    %v1543 = vmul.f32 %v1540, %v1542
    %v1544 = vadd.f32 %v1540, %v1543
    %vm1545 = vweird.f32 %v1154
    %vm1546 = vweird.f32 %v1540
    %vm1547 = vmor %vm1545, %vm1546
    %v1548 = vsel %vm1547, %v1540, %v1544
    %v1549 = vand.u32 2147483647, %v1154
    %vm1550 = vcmp.eq.f32.partialorder %v1549, 8.507059e+37
    %v1551 = vand.u32 %v1154, 2147483648
    %v1552 = vor.u32 1.1754944e-38, %v1551
    %v1553 = vsel %vm1550, %v1552, %v1548
    %v1554 = vmul.f32 1.0, %v1553
    %v1555 = vrcp.pop %v1155
    %v1556 = vmul.f32 %v1155, %v1555
    %v1557 = vsub.f32 1.0, %v1556
    %v1558 = vmul.f32 %v1555, %v1557
    %v1559 = vadd.f32 %v1555, %v1558
    %vm1560 = vweird.f32 %v1155
    %vm1561 = vweird.f32 %v1555
    %vm1562 = vmor %vm1560, %vm1561
    %v1563 = vsel %vm1562, %v1555, %v1559
    %v1564 = vand.u32 2147483647, %v1155
    %vm1565 = vcmp.eq.f32.partialorder %v1564, 8.507059e+37
    %v1566 = vand.u32 %v1155, 2147483648
    %v1567 = vor.u32 1.1754944e-38, %v1566
    %v1568 = vsel %vm1565, %v1567, %v1563
    %v1569 = vmul.f32 1.0, %v1568
    %v1570 = vrcp.pop %v1156
    %v1571 = vmul.f32 %v1156, %v1570
    %v1572 = vsub.f32 1.0, %v1571
    %v1573 = vmul.f32 %v1570, %v1572
    %v1574 = vadd.f32 %v1570, %v1573
    %vm1575 = vweird.f32 %v1156
    %vm1576 = vweird.f32 %v1570
    %vm1577 = vmor %vm1575, %vm1576
    %v1578 = vsel %vm1577, %v1570, %v1574
    %v1579 = vand.u32 2147483647, %v1156
    %vm1580 = vcmp.eq.f32.partialorder %v1579, 8.507059e+37
    %v1581 = vand.u32 %v1156, 2147483648
    %v1582 = vor.u32 1.1754944e-38, %v1581
    %v1583 = vsel %vm1580, %v1582, %v1578
    %v1584 = vmul.f32 1.0, %v1583
    %v1585 = vrcp.pop %v1157
    %v1586 = vmul.f32 %v1157, %v1585
    %v1587 = vsub.f32 1.0, %v1586
    %v1588 = vmul.f32 %v1585, %v1587
    %v1589 = vadd.f32 %v1585, %v1588
    %vm1590 = vweird.f32 %v1157
    %vm1591 = vweird.f32 %v1585
    %vm1592 = vmor %vm1590, %vm1591
    %v1593 = vsel %vm1592, %v1585, %v1589
    %v1594 = vand.u32 2147483647, %v1157
    %vm1595 = vcmp.eq.f32.partialorder %v1594, 8.507059e+37
    %v1596 = vand.u32 %v1157, 2147483648
    %v1597 = vor.u32 1.1754944e-38, %v1596
    %v1598 = vsel %vm1595, %v1597, %v1593
    %v1599 = vmul.f32 1.0, %v1598
    %v1600 = vrcp.pop %v1158
    %v1601 = vmul.f32 %v1158, %v1600
    %v1602 = vsub.f32 1.0, %v1601
    %v1603 = vmul.f32 %v1600, %v1602
    %v1604 = vadd.f32 %v1600, %v1603
    %vm1605 = vweird.f32 %v1158
    %vm1606 = vweird.f32 %v1600
    %vm1607 = vmor %vm1605, %vm1606
    %v1608 = vsel %vm1607, %v1600, %v1604
    %v1609 = vand.u32 2147483647, %v1158
    %vm1610 = vcmp.eq.f32.partialorder %v1609, 8.507059e+37
    %v1611 = vand.u32 %v1158, 2147483648
    %v1612 = vor.u32 1.1754944e-38, %v1611
    %v1613 = vsel %vm1610, %v1612, %v1608
    %v1614 = vmul.f32 1.0, %v1613
    %v1615 = vrcp.pop %v1159
    %v1616 = vmul.f32 %v1159, %v1615
    %v1617 = vsub.f32 1.0, %v1616
    %v1618 = vmul.f32 %v1615, %v1617
    %v1619 = vadd.f32 %v1615, %v1618
    %vm1620 = vweird.f32 %v1159
    %vm1621 = vweird.f32 %v1615
    %vm1622 = vmor %vm1620, %vm1621
    %v1623 = vsel %vm1622, %v1615, %v1619
    %v1624 = vand.u32 2147483647, %v1159
    %vm1625 = vcmp.eq.f32.partialorder %v1624, 8.507059e+37
    %v1626 = vand.u32 %v1159, 2147483648
    %v1627 = vor.u32 1.1754944e-38, %v1626
    %v1628 = vsel %vm1625, %v1627, %v1623
    %v1629 = vmul.f32 1.0, %v1628
    %v1630 = vrcp.pop %v1160
    %v1631 = vmul.f32 %v1160, %v1630
    %v1632 = vsub.f32 1.0, %v1631
    %v1633 = vmul.f32 %v1630, %v1632
    %v1634 = vadd.f32 %v1630, %v1633
    %vm1635 = vweird.f32 %v1160
    %vm1636 = vweird.f32 %v1630
    %vm1637 = vmor %vm1635, %vm1636
    %v1638 = vsel %vm1637, %v1630, %v1634
    %v1639 = vand.u32 2147483647, %v1160
    %vm1640 = vcmp.eq.f32.partialorder %v1639, 8.507059e+37
    %v1641 = vand.u32 %v1160, 2147483648
    %v1642 = vor.u32 1.1754944e-38, %v1641
    %v1643 = vsel %vm1640, %v1642, %v1638
    %v1644 = vmul.f32 1.0, %v1643
    %v1645 = vrcp.pop %v1161
    %v1646 = vmul.f32 %v1161, %v1645
    %v1647 = vsub.f32 1.0, %v1646
    %v1648 = vmul.f32 %v1645, %v1647
    %v1649 = vadd.f32 %v1645, %v1648
    %vm1650 = vweird.f32 %v1161
    %vm1651 = vweird.f32 %v1645
    %vm1652 = vmor %vm1650, %vm1651
    %v1653 = vsel %vm1652, %v1645, %v1649
    %v1654 = vand.u32 2147483647, %v1161
    %vm1655 = vcmp.eq.f32.partialorder %v1654, 8.507059e+37
    %v1656 = vand.u32 %v1161, 2147483648
    %v1657 = vor.u32 1.1754944e-38, %v1656
    %v1658 = vsel %vm1655, %v1657, %v1653
    %v1659 = vmul.f32 1.0, %v1658
    %v1660 = vrcp.pop %v1162
    %v1661 = vmul.f32 %v1162, %v1660
    %v1662 = vsub.f32 1.0, %v1661
    %v1663 = vmul.f32 %v1660, %v1662
    %v1664 = vadd.f32 %v1660, %v1663
    %vm1665 = vweird.f32 %v1162
    %vm1666 = vweird.f32 %v1660
    %vm1667 = vmor %vm1665, %vm1666
    %v1668 = vsel %vm1667, %v1660, %v1664
    %v1669 = vand.u32 2147483647, %v1162
    %vm1670 = vcmp.eq.f32.partialorder %v1669, 8.507059e+37
    %v1671 = vand.u32 %v1162, 2147483648
    %v1672 = vor.u32 1.1754944e-38, %v1671
    %v1673 = vsel %vm1670, %v1672, %v1668
    %v1674 = vmul.f32 1.0, %v1673
    %v1675 = vrcp.pop %v1163
    %v1676 = vmul.f32 %v1163, %v1675
    %v1677 = vsub.f32 1.0, %v1676
    %v1678 = vmul.f32 %v1675, %v1677
    %v1679 = vadd.f32 %v1675, %v1678
    %vm1680 = vweird.f32 %v1163
    %vm1681 = vweird.f32 %v1675
    %vm1682 = vmor %vm1680, %vm1681
    %v1683 = vsel %vm1682, %v1675, %v1679
    %v1684 = vand.u32 2147483647, %v1163
    %vm1685 = vcmp.eq.f32.partialorder %v1684, 8.507059e+37
    %v1686 = vand.u32 %v1163, 2147483648
    %v1687 = vor.u32 1.1754944e-38, %v1686
    %v1688 = vsel %vm1685, %v1687, %v1683
    %v1689 = vmul.f32 1.0, %v1688
    %v1690 = vrcp.pop %v1164
    %v1691 = vmul.f32 %v1164, %v1690
    %v1692 = vsub.f32 1.0, %v1691
    %v1693 = vmul.f32 %v1690, %v1692
    %v1694 = vadd.f32 %v1690, %v1693
    %vm1695 = vweird.f32 %v1164
    %vm1696 = vweird.f32 %v1690
    %vm1697 = vmor %vm1695, %vm1696
    %v1698 = vsel %vm1697, %v1690, %v1694
    %v1699 = vand.u32 2147483647, %v1164
    %vm1700 = vcmp.eq.f32.partialorder %v1699, 8.507059e+37
    %v1701 = vand.u32 %v1164, 2147483648
    %v1702 = vor.u32 1.1754944e-38, %v1701
    %v1703 = vsel %vm1700, %v1702, %v1698
    %v1704 = vmul.f32 1.0, %v1703
    %v1705 = vrcp.pop %v1165
    %v1706 = vmul.f32 %v1165, %v1705
    %v1707 = vsub.f32 1.0, %v1706
    %v1708 = vmul.f32 %v1705, %v1707
    %v1709 = vadd.f32 %v1705, %v1708
    %vm1710 = vweird.f32 %v1165
    %vm1711 = vweird.f32 %v1705
    %vm1712 = vmor %vm1710, %vm1711
    %v1713 = vsel %vm1712, %v1705, %v1709
    %v1714 = vand.u32 2147483647, %v1165
    %vm1715 = vcmp.eq.f32.partialorder %v1714, 8.507059e+37
    %v1716 = vand.u32 %v1165, 2147483648
    %v1717 = vor.u32 1.1754944e-38, %v1716
    %v1718 = vsel %vm1715, %v1717, %v1713
    %v1719 = vmul.f32 1.0, %v1718
    %v1720 = vrcp.pop %v1166
    %v1721 = vmul.f32 %v1166, %v1720
    %v1722 = vsub.f32 1.0, %v1721
    %v1723 = vmul.f32 %v1720, %v1722
    %v1724 = vadd.f32 %v1720, %v1723
    %vm1725 = vweird.f32 %v1166
    %vm1726 = vweird.f32 %v1720
    %vm1727 = vmor %vm1725, %vm1726
    %v1728 = vsel %vm1727, %v1720, %v1724
    %v1729 = vand.u32 2147483647, %v1166
    %vm1730 = vcmp.eq.f32.partialorder %v1729, 8.507059e+37
    %v1731 = vand.u32 %v1166, 2147483648
    %v1732 = vor.u32 1.1754944e-38, %v1731
    %v1733 = vsel %vm1730, %v1732, %v1728
    %v1734 = vmul.f32 1.0, %v1733
    %v1735 = vrcp.pop %v1167
    %v1736 = vmul.f32 %v1167, %v1735
    %v1737 = vsub.f32 1.0, %v1736
    %v1738 = vmul.f32 %v1735, %v1737
    %v1739 = vadd.f32 %v1735, %v1738
    %vm1740 = vweird.f32 %v1167
    %vm1741 = vweird.f32 %v1735
    %vm1742 = vmor %vm1740, %vm1741
    %v1743 = vsel %vm1742, %v1735, %v1739
    %v1744 = vand.u32 2147483647, %v1167
    %vm1745 = vcmp.eq.f32.partialorder %v1744, 8.507059e+37
    %v1746 = vand.u32 %v1167, 2147483648
    %v1747 = vor.u32 1.1754944e-38, %v1746
    %v1748 = vsel %vm1745, %v1747, %v1743
    %v1749 = vmul.f32 1.0, %v1748
    %v1750 = vrcp.pop %v1168
    %v1751 = vmul.f32 %v1168, %v1750
    %v1752 = vsub.f32 1.0, %v1751
    %v1753 = vmul.f32 %v1750, %v1752
    %v1754 = vadd.f32 %v1750, %v1753
    %vm1755 = vweird.f32 %v1168
    %vm1756 = vweird.f32 %v1750
    %vm1757 = vmor %vm1755, %vm1756
    %v1758 = vsel %vm1757, %v1750, %v1754
    %v1759 = vand.u32 2147483647, %v1168
    %vm1760 = vcmp.eq.f32.partialorder %v1759, 8.507059e+37
    %v1761 = vand.u32 %v1168, 2147483648
    %v1762 = vor.u32 1.1754944e-38, %v1761
    %v1763 = vsel %vm1760, %v1762, %v1758
    %v1764 = vmul.f32 1.0, %v1763
    %v1765 = vrcp.pop %v1169
    %v1766 = vmul.f32 %v1169, %v1765
    %v1767 = vsub.f32 1.0, %v1766
    %v1768 = vmul.f32 %v1765, %v1767
    %v1769 = vadd.f32 %v1765, %v1768
    %vm1770 = vweird.f32 %v1169
    %vm1771 = vweird.f32 %v1765
    %vm1772 = vmor %vm1770, %vm1771
    %v1773 = vsel %vm1772, %v1765, %v1769
    %v1774 = vand.u32 2147483647, %v1169
    %vm1775 = vcmp.eq.f32.partialorder %v1774, 8.507059e+37
    %v1776 = vand.u32 %v1169, 2147483648
    %v1777 = vor.u32 1.1754944e-38, %v1776
    %v1778 = vsel %vm1775, %v1777, %v1773
    %v1779 = vmul.f32 1.0, %v1778
    %v1780 = vrcp.pop %v1170
    %v1781 = vmul.f32 %v1170, %v1780
    %v1782 = vsub.f32 1.0, %v1781
    %v1783 = vmul.f32 %v1780, %v1782
    %v1784 = vadd.f32 %v1780, %v1783
    %vm1785 = vweird.f32 %v1170
    %vm1786 = vweird.f32 %v1780
    %vm1787 = vmor %vm1785, %vm1786
    %v1788 = vsel %vm1787, %v1780, %v1784
    %v1789 = vand.u32 2147483647, %v1170
    %vm1790 = vcmp.eq.f32.partialorder %v1789, 8.507059e+37
    %v1791 = vand.u32 %v1170, 2147483648
    %v1792 = vor.u32 1.1754944e-38, %v1791
    %v1793 = vsel %vm1790, %v1792, %v1788
    %v1794 = vmul.f32 1.0, %v1793
    %v1795 = vrcp.pop %v1171
    %v1796 = vmul.f32 %v1171, %v1795
    %v1797 = vsub.f32 1.0, %v1796
    %v1798 = vmul.f32 %v1795, %v1797
    %v1799 = vadd.f32 %v1795, %v1798
    %vm1800 = vweird.f32 %v1171
    %vm1801 = vweird.f32 %v1795
    %vm1802 = vmor %vm1800, %vm1801
    %v1803 = vsel %vm1802, %v1795, %v1799
    %v1804 = vand.u32 2147483647, %v1171
    %vm1805 = vcmp.eq.f32.partialorder %v1804, 8.507059e+37
    %v1806 = vand.u32 %v1171, 2147483648
    %v1807 = vor.u32 1.1754944e-38, %v1806
    %v1808 = vsel %vm1805, %v1807, %v1803
    %v1809 = vmul.f32 1.0, %v1808
    %v1810 = vrcp.pop %v1172
    %v1811 = vmul.f32 %v1172, %v1810
    %v1812 = vsub.f32 1.0, %v1811
    %v1813 = vmul.f32 %v1810, %v1812
    %v1814 = vadd.f32 %v1810, %v1813
    %vm1815 = vweird.f32 %v1172
    %vm1816 = vweird.f32 %v1810
    %vm1817 = vmor %vm1815, %vm1816
    %v1818 = vsel %vm1817, %v1810, %v1814
    %v1819 = vand.u32 2147483647, %v1172
    %vm1820 = vcmp.eq.f32.partialorder %v1819, 8.507059e+37
    %v1821 = vand.u32 %v1172, 2147483648
    %v1822 = vor.u32 1.1754944e-38, %v1821
    %v1823 = vsel %vm1820, %v1822, %v1818
    %v1824 = vmul.f32 1.0, %v1823
    %v1825 = vrcp.pop %v1173
    %v1826 = vmul.f32 %v1173, %v1825
    %v1827 = vsub.f32 1.0, %v1826
    %v1828 = vmul.f32 %v1825, %v1827
    %v1829 = vadd.f32 %v1825, %v1828
    %vm1830 = vweird.f32 %v1173
    %vm1831 = vweird.f32 %v1825
    %vm1832 = vmor %vm1830, %vm1831
    %v1833 = vsel %vm1832, %v1825, %v1829
    %v1834 = vand.u32 2147483647, %v1173
    %vm1835 = vcmp.eq.f32.partialorder %v1834, 8.507059e+37
    %v1836 = vand.u32 %v1173, 2147483648
    %v1837 = vor.u32 1.1754944e-38, %v1836
    %v1838 = vsel %vm1835, %v1837, %v1833
    %v1839 = vmul.f32 1.0, %v1838
    %v1840 = vrcp.pop %v1174
    %v1841 = vmul.f32 %v1174, %v1840
    %v1842 = vsub.f32 1.0, %v1841
    %v1843 = vmul.f32 %v1840, %v1842
    %v1844 = vadd.f32 %v1840, %v1843
    %vm1845 = vweird.f32 %v1174
    %vm1846 = vweird.f32 %v1840
    %vm1847 = vmor %vm1845, %vm1846
    %v1848 = vsel %vm1847, %v1840, %v1844
    %v1849 = vand.u32 2147483647, %v1174
    %vm1850 = vcmp.eq.f32.partialorder %v1849, 8.507059e+37
    %v1851 = vand.u32 %v1174, 2147483648
    %v1852 = vor.u32 1.1754944e-38, %v1851
    %v1853 = vsel %vm1850, %v1852, %v1848
    %v1854 = vmul.f32 1.0, %v1853
    %v1855 = vrcp.pop %v1175
    %v1856 = vmul.f32 %v1175, %v1855
    %v1857 = vsub.f32 1.0, %v1856
    %v1858 = vmul.f32 %v1855, %v1857
    %v1859 = vadd.f32 %v1855, %v1858
    %vm1860 = vweird.f32 %v1175
    %vm1861 = vweird.f32 %v1855
    %vm1862 = vmor %vm1860, %vm1861
    %v1863 = vsel %vm1862, %v1855, %v1859
    %v1864 = vand.u32 2147483647, %v1175
    %vm1865 = vcmp.eq.f32.partialorder %v1864, 8.507059e+37
    %v1866 = vand.u32 %v1175, 2147483648
    %v1867 = vor.u32 1.1754944e-38, %v1866
    %v1868 = vsel %vm1865, %v1867, %v1863
    %v1869 = vmul.f32 1.0, %v1868
    %v1870 = vrcp.pop %v1176
    %v1871 = vmul.f32 %v1176, %v1870
    %v1872 = vsub.f32 1.0, %v1871
    %v1873 = vmul.f32 %v1870, %v1872
    %v1874 = vadd.f32 %v1870, %v1873
    %vm1875 = vweird.f32 %v1176
    %vm1876 = vweird.f32 %v1870
    %vm1877 = vmor %vm1875, %vm1876
    %v1878 = vsel %vm1877, %v1870, %v1874
    %v1879 = vand.u32 2147483647, %v1176
    %vm1880 = vcmp.eq.f32.partialorder %v1879, 8.507059e+37
    %v1881 = vand.u32 %v1176, 2147483648
    %v1882 = vor.u32 1.1754944e-38, %v1881
    %v1883 = vsel %vm1880, %v1882, %v1878
    %v1884 = vmul.f32 1.0, %v1883
    %v1885 = vrcp.pop %v1177
    %v1886 = vmul.f32 %v1177, %v1885
    %v1887 = vsub.f32 1.0, %v1886
    %v1888 = vmul.f32 %v1885, %v1887
    %v1889 = vadd.f32 %v1885, %v1888
    %vm1890 = vweird.f32 %v1177
    %vm1891 = vweird.f32 %v1885
    %vm1892 = vmor %vm1890, %vm1891
    %v1893 = vsel %vm1892, %v1885, %v1889
    %v1894 = vand.u32 2147483647, %v1177
    %vm1895 = vcmp.eq.f32.partialorder %v1894, 8.507059e+37
    %v1896 = vand.u32 %v1177, 2147483648
    %v1897 = vor.u32 1.1754944e-38, %v1896
    %v1898 = vsel %vm1895, %v1897, %v1893
    %v1899 = vmul.f32 1.0, %v1898
    %v1900 = vrcp.pop %v1178
    %v1901 = vmul.f32 %v1178, %v1900
    %v1902 = vsub.f32 1.0, %v1901
    %v1903 = vmul.f32 %v1900, %v1902
    %v1904 = vadd.f32 %v1900, %v1903
    %vm1905 = vweird.f32 %v1178
    %vm1906 = vweird.f32 %v1900
    %vm1907 = vmor %vm1905, %vm1906
    %v1908 = vsel %vm1907, %v1900, %v1904
    %v1909 = vand.u32 2147483647, %v1178
    %vm1910 = vcmp.eq.f32.partialorder %v1909, 8.507059e+37
    %v1911 = vand.u32 %v1178, 2147483648
    %v1912 = vor.u32 1.1754944e-38, %v1911
    %v1913 = vsel %vm1910, %v1912, %v1908
    %v1914 = vmul.f32 1.0, %v1913
    %v1915 = vrcp.pop %v1179
    %v1916 = vmul.f32 %v1179, %v1915
    %v1917 = vsub.f32 1.0, %v1916
    %v1918 = vmul.f32 %v1915, %v1917
    %v1919 = vadd.f32 %v1915, %v1918
    %vm1920 = vweird.f32 %v1179
    %vm1921 = vweird.f32 %v1915
    %vm1922 = vmor %vm1920, %vm1921
    %v1923 = vsel %vm1922, %v1915, %v1919
    %v1924 = vand.u32 2147483647, %v1179
    %vm1925 = vcmp.eq.f32.partialorder %v1924, 8.507059e+37
    %v1926 = vand.u32 %v1179, 2147483648
    %v1927 = vor.u32 1.1754944e-38, %v1926
    %v1928 = vsel %vm1925, %v1927, %v1923
    %v1929 = vmul.f32 1.0, %v1928
    %v1930 = vrcp.pop %v1180
    %v1931 = vmul.f32 %v1180, %v1930
    %v1932 = vsub.f32 1.0, %v1931
    %v1933 = vmul.f32 %v1930, %v1932
    %v1934 = vadd.f32 %v1930, %v1933
    %vm1935 = vweird.f32 %v1180
    %vm1936 = vweird.f32 %v1930
    %vm1937 = vmor %vm1935, %vm1936
    %v1938 = vsel %vm1937, %v1930, %v1934
    %v1939 = vand.u32 2147483647, %v1180
    %vm1940 = vcmp.eq.f32.partialorder %v1939, 8.507059e+37
    %v1941 = vand.u32 %v1180, 2147483648
    %v1942 = vor.u32 1.1754944e-38, %v1941
    %v1943 = vsel %vm1940, %v1942, %v1938
    %v1944 = vmul.f32 1.0, %v1943
    %v1945 = vrcp.pop %v1181
    %v1946 = vmul.f32 %v1181, %v1945
    %v1947 = vsub.f32 1.0, %v1946
    %v1948 = vmul.f32 %v1945, %v1947
    %v1949 = vadd.f32 %v1945, %v1948
    %vm1950 = vweird.f32 %v1181
    %vm1951 = vweird.f32 %v1945
    %vm1952 = vmor %vm1950, %vm1951
    %v1953 = vsel %vm1952, %v1945, %v1949
    %v1954 = vand.u32 2147483647, %v1181
    %vm1955 = vcmp.eq.f32.partialorder %v1954, 8.507059e+37
    %v1956 = vand.u32 %v1181, 2147483648
    %v1957 = vor.u32 1.1754944e-38, %v1956
    %v1958 = vsel %vm1955, %v1957, %v1953
    %v1959 = vmul.f32 1.0, %v1958
    %v1960 = vrcp.pop %v1182
    %v1961 = vmul.f32 %v1182, %v1960
    %v1962 = vsub.f32 1.0, %v1961
    %v1963 = vmul.f32 %v1960, %v1962
    %v1964 = vadd.f32 %v1960, %v1963
    %vm1965 = vweird.f32 %v1182
    %vm1966 = vweird.f32 %v1960
    %vm1967 = vmor %vm1965, %vm1966
    %v1968 = vsel %vm1967, %v1960, %v1964
    %v1969 = vand.u32 2147483647, %v1182
    %vm1970 = vcmp.eq.f32.partialorder %v1969, 8.507059e+37
    %v1971 = vand.u32 %v1182, 2147483648
    %v1972 = vor.u32 1.1754944e-38, %v1971
    %v1973 = vsel %vm1970, %v1972, %v1968
    %v1974 = vmul.f32 1.0, %v1973
    %v1975 = vrcp.pop %v1183
    %v1976 = vmul.f32 %v1183, %v1975
    %v1977 = vsub.f32 1.0, %v1976
    %v1978 = vmul.f32 %v1975, %v1977
    %v1979 = vadd.f32 %v1975, %v1978
    %vm1980 = vweird.f32 %v1183
    %vm1981 = vweird.f32 %v1975
    %vm1982 = vmor %vm1980, %vm1981
    %v1983 = vsel %vm1982, %v1975, %v1979
    %v1984 = vand.u32 2147483647, %v1183
    %vm1985 = vcmp.eq.f32.partialorder %v1984, 8.507059e+37
    %v1986 = vand.u32 %v1183, 2147483648
    %v1987 = vor.u32 1.1754944e-38, %v1986
    %v1988 = vsel %vm1985, %v1987, %v1983
    %v1989 = vmul.f32 1.0, %v1988
    %v1990 = vrcp.pop %v1184
    %v1991 = vmul.f32 %v1184, %v1990
    %v1992 = vsub.f32 1.0, %v1991
    %v1993 = vmul.f32 %v1990, %v1992
    %v1994 = vadd.f32 %v1990, %v1993
    %vm1995 = vweird.f32 %v1184
    %vm1996 = vweird.f32 %v1990
    %vm1997 = vmor %vm1995, %vm1996
    %v1998 = vsel %vm1997, %v1990, %v1994
    %v1999 = vand.u32 2147483647, %v1184
    %vm2000 = vcmp.eq.f32.partialorder %v1999, 8.507059e+37
    %v2001 = vand.u32 %v1184, 2147483648
    %v2002 = vor.u32 1.1754944e-38, %v2001
    %v2003 = vsel %vm2000, %v2002, %v1998
    %v2004 = vmul.f32 1.0, %v2003
    %v2005 = vrcp.pop %v1185
    %v2006 = vmul.f32 %v1185, %v2005
    %v2007 = vsub.f32 1.0, %v2006
    %v2008 = vmul.f32 %v2005, %v2007
    %v2009 = vadd.f32 %v2005, %v2008
    %vm2010 = vweird.f32 %v1185
    %vm2011 = vweird.f32 %v2005
    %vm2012 = vmor %vm2010, %vm2011
    %v2013 = vsel %vm2012, %v2005, %v2009
    %v2014 = vand.u32 2147483647, %v1185
    %vm2015 = vcmp.eq.f32.partialorder %v2014, 8.507059e+37
    %v2016 = vand.u32 %v1185, 2147483648
    %v2017 = vor.u32 1.1754944e-38, %v2016
    %v2018 = vsel %vm2015, %v2017, %v2013
    %v2019 = vmul.f32 1.0, %v2018
    %v2020 = vrcp.pop %v1186
    %v2021 = vmul.f32 %v1186, %v2020
    %v2022 = vsub.f32 1.0, %v2021
    %v2023 = vmul.f32 %v2020, %v2022
    %v2024 = vadd.f32 %v2020, %v2023
    %vm2025 = vweird.f32 %v1186
    %vm2026 = vweird.f32 %v2020
    %vm2027 = vmor %vm2025, %vm2026
    %v2028 = vsel %vm2027, %v2020, %v2024
    %v2029 = vand.u32 2147483647, %v1186
    %vm2030 = vcmp.eq.f32.partialorder %v2029, 8.507059e+37
    %v2031 = vand.u32 %v1186, 2147483648
    %v2032 = vor.u32 1.1754944e-38, %v2031
    %v2033 = vsel %vm2030, %v2032, %v2028
    %v2034 = vmul.f32 1.0, %v2033
    %v2035 = vrcp.pop %v1187
    %v2036 = vmul.f32 %v1187, %v2035
    %v2037 = vsub.f32 1.0, %v2036
    %v2038 = vmul.f32 %v2035, %v2037
    %v2039 = vadd.f32 %v2035, %v2038
    %vm2040 = vweird.f32 %v1187
    %vm2041 = vweird.f32 %v2035
    %vm2042 = vmor %vm2040, %vm2041
    %v2043 = vsel %vm2042, %v2035, %v2039
    %v2044 = vand.u32 2147483647, %v1187
    %vm2045 = vcmp.eq.f32.partialorder %v2044, 8.507059e+37
    %v2046 = vand.u32 %v1187, 2147483648
    %v2047 = vor.u32 1.1754944e-38, %v2046
    %v2048 = vsel %vm2045, %v2047, %v2043
    %v2049 = vmul.f32 1.0, %v2048
    %v2050 = vrcp.pop %v1188
    %v2051 = vmul.f32 %v1188, %v2050
    %v2052 = vsub.f32 1.0, %v2051
    %v2053 = vmul.f32 %v2050, %v2052
    %v2054 = vadd.f32 %v2050, %v2053
    %vm2055 = vweird.f32 %v1188
    %vm2056 = vweird.f32 %v2050
    %vm2057 = vmor %vm2055, %vm2056
    %v2058 = vsel %vm2057, %v2050, %v2054
    %v2059 = vand.u32 2147483647, %v1188
    %vm2060 = vcmp.eq.f32.partialorder %v2059, 8.507059e+37
    %v2061 = vand.u32 %v1188, 2147483648
    %v2062 = vor.u32 1.1754944e-38, %v2061
    %v2063 = vsel %vm2060, %v2062, %v2058
    %v2064 = vmul.f32 1.0, %v2063
    %v2065 = vrcp.pop %v1189
    %v2066 = vmul.f32 %v1189, %v2065
    %v2067 = vsub.f32 1.0, %v2066
    %v2068 = vmul.f32 %v2065, %v2067
    %v2069 = vadd.f32 %v2065, %v2068
    %vm2070 = vweird.f32 %v1189
    %vm2071 = vweird.f32 %v2065
    %vm2072 = vmor %vm2070, %vm2071
    %v2073 = vsel %vm2072, %v2065, %v2069
    %v2074 = vand.u32 2147483647, %v1189
    %vm2075 = vcmp.eq.f32.partialorder %v2074, 8.507059e+37
    %v2076 = vand.u32 %v1189, 2147483648
    %v2077 = vor.u32 1.1754944e-38, %v2076
    %v2078 = vsel %vm2075, %v2077, %v2073
    %v2079 = vmul.f32 1.0, %v2078
    %v2080 = vrcp.pop %v1190
    %v2081 = vmul.f32 %v1190, %v2080
    %v2082 = vsub.f32 1.0, %v2081
    %v2083 = vmul.f32 %v2080, %v2082
    %v2084 = vadd.f32 %v2080, %v2083
    %vm2085 = vweird.f32 %v1190
    %vm2086 = vweird.f32 %v2080
    %vm2087 = vmor %vm2085, %vm2086
    %v2088 = vsel %vm2087, %v2080, %v2084
    %v2089 = vand.u32 2147483647, %v1190
    %vm2090 = vcmp.eq.f32.partialorder %v2089, 8.507059e+37
    %v2091 = vand.u32 %v1190, 2147483648
    %v2092 = vor.u32 1.1754944e-38, %v2091
    %v2093 = vsel %vm2090, %v2092, %v2088
    %v2094 = vmul.f32 1.0, %v2093
    %v2095 = vrcp.pop %v1191
    %v2096 = vmul.f32 %v1191, %v2095
    %v2097 = vsub.f32 1.0, %v2096
    %v2098 = vmul.f32 %v2095, %v2097
    %v2099 = vadd.f32 %v2095, %v2098
    %vm2100 = vweird.f32 %v1191
    %vm2101 = vweird.f32 %v2095
    %vm2102 = vmor %vm2100, %vm2101
    %v2103 = vsel %vm2102, %v2095, %v2099
    %v2104 = vand.u32 2147483647, %v1191
    %vm2105 = vcmp.eq.f32.partialorder %v2104, 8.507059e+37
    %v2106 = vand.u32 %v1191, 2147483648
    %v2107 = vor.u32 1.1754944e-38, %v2106
    %v2108 = vsel %vm2105, %v2107, %v2103
    %v2109 = vmul.f32 1.0, %v2108
    %v2110 = vrcp.pop %v1192
    %v2111 = vmul.f32 %v1192, %v2110
    %v2112 = vsub.f32 1.0, %v2111
    %v2113 = vmul.f32 %v2110, %v2112
    %v2114 = vadd.f32 %v2110, %v2113
    %vm2115 = vweird.f32 %v1192
    %vm2116 = vweird.f32 %v2110
    %vm2117 = vmor %vm2115, %vm2116
    %v2118 = vsel %vm2117, %v2110, %v2114
    %v2119 = vand.u32 2147483647, %v1192
    %vm2120 = vcmp.eq.f32.partialorder %v2119, 8.507059e+37
    %v2121 = vand.u32 %v1192, 2147483648
    %v2122 = vor.u32 1.1754944e-38, %v2121
    %v2123 = vsel %vm2120, %v2122, %v2118
    %v2124 = vmul.f32 1.0, %v2123
    %v2125 = vrcp.pop %v1193
    %v2126 = vmul.f32 %v1193, %v2125
    %v2127 = vsub.f32 1.0, %v2126
    %v2128 = vmul.f32 %v2125, %v2127
    %v2129 = vadd.f32 %v2125, %v2128
    %vm2130 = vweird.f32 %v1193
    %vm2131 = vweird.f32 %v2125
    %vm2132 = vmor %vm2130, %vm2131
    %v2133 = vsel %vm2132, %v2125, %v2129
    %v2134 = vand.u32 2147483647, %v1193
    %vm2135 = vcmp.eq.f32.partialorder %v2134, 8.507059e+37
    %v2136 = vand.u32 %v1193, 2147483648
    %v2137 = vor.u32 1.1754944e-38, %v2136
    %v2138 = vsel %vm2135, %v2137, %v2133
    %v2139 = vmul.f32 1.0, %v2138
    %v2140 = vrcp.pop %v1194
    %v2141 = vmul.f32 %v1194, %v2140
    %v2142 = vsub.f32 1.0, %v2141
    %v2143 = vmul.f32 %v2140, %v2142
    %v2144 = vadd.f32 %v2140, %v2143
    %vm2145 = vweird.f32 %v1194
    %vm2146 = vweird.f32 %v2140
    %vm2147 = vmor %vm2145, %vm2146
    %v2148 = vsel %vm2147, %v2140, %v2144
    %v2149 = vand.u32 2147483647, %v1194
    %vm2150 = vcmp.eq.f32.partialorder %v2149, 8.507059e+37
    %v2151 = vand.u32 %v1194, 2147483648
    %v2152 = vor.u32 1.1754944e-38, %v2151
    %v2153 = vsel %vm2150, %v2152, %v2148
    %v2154 = vmul.f32 1.0, %v2153
    %v2155 = vrcp.pop %v1195
    %v2156 = vmul.f32 %v1195, %v2155
    %v2157 = vsub.f32 1.0, %v2156
    %v2158 = vmul.f32 %v2155, %v2157
    %v2159 = vadd.f32 %v2155, %v2158
    %vm2160 = vweird.f32 %v1195
    %vm2161 = vweird.f32 %v2155
    %vm2162 = vmor %vm2160, %vm2161
    %v2163 = vsel %vm2162, %v2155, %v2159
    %v2164 = vand.u32 2147483647, %v1195
    %vm2165 = vcmp.eq.f32.partialorder %v2164, 8.507059e+37
    %v2166 = vand.u32 %v1195, 2147483648
    %v2167 = vor.u32 1.1754944e-38, %v2166
    %v2168 = vsel %vm2165, %v2167, %v2163
    %v2169 = vmul.f32 1.0, %v2168
    %v2170 = vrcp.pop %v1196
    %v2171 = vmul.f32 %v1196, %v2170
    %v2172 = vsub.f32 1.0, %v2171
    %v2173 = vmul.f32 %v2170, %v2172
    %v2174 = vadd.f32 %v2170, %v2173
    %vm2175 = vweird.f32 %v1196
    %vm2176 = vweird.f32 %v2170
    %vm2177 = vmor %vm2175, %vm2176
    %v2178 = vsel %vm2177, %v2170, %v2174
    %v2179 = vand.u32 2147483647, %v1196
    %vm2180 = vcmp.eq.f32.partialorder %v2179, 8.507059e+37
    %v2181 = vand.u32 %v1196, 2147483648
    %v2182 = vor.u32 1.1754944e-38, %v2181
    %v2183 = vsel %vm2180, %v2182, %v2178
    %v2184 = vmul.f32 1.0, %v2183
    %v2185 = vrcp.pop %v1197
    %v2186 = vmul.f32 %v1197, %v2185
    %v2187 = vsub.f32 1.0, %v2186
    %v2188 = vmul.f32 %v2185, %v2187
    %v2189 = vadd.f32 %v2185, %v2188
    %vm2190 = vweird.f32 %v1197
    %vm2191 = vweird.f32 %v2185
    %vm2192 = vmor %vm2190, %vm2191
    %v2193 = vsel %vm2192, %v2185, %v2189
    %v2194 = vand.u32 2147483647, %v1197
    %vm2195 = vcmp.eq.f32.partialorder %v2194, 8.507059e+37
    %v2196 = vand.u32 %v1197, 2147483648
    %v2197 = vor.u32 1.1754944e-38, %v2196
    %v2198 = vsel %vm2195, %v2197, %v2193
    %v2199 = vmul.f32 1.0, %v2198
    %v2200 = vrcp.pop %v1198
    %v2201 = vmul.f32 %v1198, %v2200
    %v2202 = vsub.f32 1.0, %v2201
    %v2203 = vmul.f32 %v2200, %v2202
    %v2204 = vadd.f32 %v2200, %v2203
    %vm2205 = vweird.f32 %v1198
    %vm2206 = vweird.f32 %v2200
    %vm2207 = vmor %vm2205, %vm2206
    %v2208 = vsel %vm2207, %v2200, %v2204
    %v2209 = vand.u32 2147483647, %v1198
    %vm2210 = vcmp.eq.f32.partialorder %v2209, 8.507059e+37
    %v2211 = vand.u32 %v1198, 2147483648
    %v2212 = vor.u32 1.1754944e-38, %v2211
    %v2213 = vsel %vm2210, %v2212, %v2208
    %v2214 = vmul.f32 1.0, %v2213
    %v2215 = vrcp.pop %v1199
    %v2216 = vmul.f32 %v1199, %v2215
    %v2217 = vsub.f32 1.0, %v2216
    %v2218 = vmul.f32 %v2215, %v2217
    %v2219 = vadd.f32 %v2215, %v2218
    %vm2220 = vweird.f32 %v1199
    %vm2221 = vweird.f32 %v2215
    %vm2222 = vmor %vm2220, %vm2221
    %v2223 = vsel %vm2222, %v2215, %v2219
    %v2224 = vand.u32 2147483647, %v1199
    %vm2225 = vcmp.eq.f32.partialorder %v2224, 8.507059e+37
    %v2226 = vand.u32 %v1199, 2147483648
    %v2227 = vor.u32 1.1754944e-38, %v2226
    %v2228 = vsel %vm2225, %v2227, %v2223
    %v2229 = vmul.f32 1.0, %v2228
    %v2230 = vrcp.pop %v1200
    %v2231 = vmul.f32 %v1200, %v2230
    %v2232 = vsub.f32 1.0, %v2231
    %v2233 = vmul.f32 %v2230, %v2232
    %v2234 = vadd.f32 %v2230, %v2233
    %vm2235 = vweird.f32 %v1200
    %vm2236 = vweird.f32 %v2230
    %vm2237 = vmor %vm2235, %vm2236
    %v2238 = vsel %vm2237, %v2230, %v2234
    %v2239 = vand.u32 2147483647, %v1200
    %vm2240 = vcmp.eq.f32.partialorder %v2239, 8.507059e+37
    %v2241 = vand.u32 %v1200, 2147483648
    %v2242 = vor.u32 1.1754944e-38, %v2241
    %v2243 = vsel %vm2240, %v2242, %v2238
    %v2244 = vmul.f32 1.0, %v2243
    %v2245 = vrcp.pop %v1201
    %v2246 = vmul.f32 %v1201, %v2245
    %v2247 = vsub.f32 1.0, %v2246
    %v2248 = vmul.f32 %v2245, %v2247
    %v2249 = vadd.f32 %v2245, %v2248
    %vm2250 = vweird.f32 %v1201
    %vm2251 = vweird.f32 %v2245
    %vm2252 = vmor %vm2250, %vm2251
    %v2253 = vsel %vm2252, %v2245, %v2249
    %v2254 = vand.u32 2147483647, %v1201
    %vm2255 = vcmp.eq.f32.partialorder %v2254, 8.507059e+37
    %v2256 = vand.u32 %v1201, 2147483648
    %v2257 = vor.u32 1.1754944e-38, %v2256
    %v2258 = vsel %vm2255, %v2257, %v2253
    %v2259 = vmul.f32 1.0, %v2258
    %v2260 = vrcp.pop %v1202
    %v2261 = vmul.f32 %v1202, %v2260
    %v2262 = vsub.f32 1.0, %v2261
    %v2263 = vmul.f32 %v2260, %v2262
    %v2264 = vadd.f32 %v2260, %v2263
    %vm2265 = vweird.f32 %v1202
    %vm2266 = vweird.f32 %v2260
    %vm2267 = vmor %vm2265, %vm2266
    %v2268 = vsel %vm2267, %v2260, %v2264
    %v2269 = vand.u32 2147483647, %v1202
    %vm2270 = vcmp.eq.f32.partialorder %v2269, 8.507059e+37
    %v2271 = vand.u32 %v1202, 2147483648
    %v2272 = vor.u32 1.1754944e-38, %v2271
    %v2273 = vsel %vm2270, %v2272, %v2268
    %v2274 = vmul.f32 1.0, %v2273
    %v2275 = vrcp.pop %v1203
    %v2276 = vmul.f32 %v1203, %v2275
    %v2277 = vsub.f32 1.0, %v2276
    %v2278 = vmul.f32 %v2275, %v2277
    %v2279 = vadd.f32 %v2275, %v2278
    %vm2280 = vweird.f32 %v1203
    %vm2281 = vweird.f32 %v2275
    %vm2282 = vmor %vm2280, %vm2281
    %v2283 = vsel %vm2282, %v2275, %v2279
    %v2284 = vand.u32 2147483647, %v1203
    %vm2285 = vcmp.eq.f32.partialorder %v2284, 8.507059e+37
    %v2286 = vand.u32 %v1203, 2147483648
    %v2287 = vor.u32 1.1754944e-38, %v2286
    %v2288 = vsel %vm2285, %v2287, %v2283
    %v2289 = vmul.f32 1.0, %v2288
    %v2290 = vrcp.pop %v1204
    %v2291 = vmul.f32 %v1204, %v2290
    %v2292 = vsub.f32 1.0, %v2291
    %v2293 = vmul.f32 %v2290, %v2292
    %v2294 = vadd.f32 %v2290, %v2293
    %vm2295 = vweird.f32 %v1204
    %vm2296 = vweird.f32 %v2290
    %vm2297 = vmor %vm2295, %vm2296
    %v2298 = vsel %vm2297, %v2290, %v2294
    %v2299 = vand.u32 2147483647, %v1204
    %vm2300 = vcmp.eq.f32.partialorder %v2299, 8.507059e+37
    %v2301 = vand.u32 %v1204, 2147483648
    %v2302 = vor.u32 1.1754944e-38, %v2301
    %v2303 = vsel %vm2300, %v2302, %v2298
    %v2304 = vmul.f32 1.0, %v2303
    %v2305 = vrcp.pop %v1205
    %v2306 = vmul.f32 %v1205, %v2305
    %v2307 = vsub.f32 1.0, %v2306
    %v2308 = vmul.f32 %v2305, %v2307
    %v2309 = vadd.f32 %v2305, %v2308
    %vm2310 = vweird.f32 %v1205
    %vm2311 = vweird.f32 %v2305
    %vm2312 = vmor %vm2310, %vm2311
    %v2313 = vsel %vm2312, %v2305, %v2309
    %v2314 = vand.u32 2147483647, %v1205
    %vm2315 = vcmp.eq.f32.partialorder %v2314, 8.507059e+37
    %v2316 = vand.u32 %v1205, 2147483648
    %v2317 = vor.u32 1.1754944e-38, %v2316
    %v2318 = vsel %vm2315, %v2317, %v2313
    %v2319 = vmul.f32 1.0, %v2318
    %v2320 = vrcp.pop %v1206
    %v2321 = vmul.f32 %v1206, %v2320
    %v2322 = vsub.f32 1.0, %v2321
    %v2323 = vmul.f32 %v2320, %v2322
    %v2324 = vadd.f32 %v2320, %v2323
    %vm2325 = vweird.f32 %v1206
    %vm2326 = vweird.f32 %v2320
    %vm2327 = vmor %vm2325, %vm2326
    %v2328 = vsel %vm2327, %v2320, %v2324
    %v2329 = vand.u32 2147483647, %v1206
    %vm2330 = vcmp.eq.f32.partialorder %v2329, 8.507059e+37
    %v2331 = vand.u32 %v1206, 2147483648
    %v2332 = vor.u32 1.1754944e-38, %v2331
    %v2333 = vsel %vm2330, %v2332, %v2328
    %v2334 = vmul.f32 1.0, %v2333
    %v2335 = vrcp.pop %v1207
    %v2336 = vmul.f32 %v1207, %v2335
    %v2337 = vsub.f32 1.0, %v2336
    %v2338 = vmul.f32 %v2335, %v2337
    %v2339 = vadd.f32 %v2335, %v2338
    %vm2340 = vweird.f32 %v1207
    %vm2341 = vweird.f32 %v2335
    %vm2342 = vmor %vm2340, %vm2341
    %v2343 = vsel %vm2342, %v2335, %v2339
    %v2344 = vand.u32 2147483647, %v1207
    %vm2345 = vcmp.eq.f32.partialorder %v2344, 8.507059e+37
    %v2346 = vand.u32 %v1207, 2147483648
    %v2347 = vor.u32 1.1754944e-38, %v2346
    %v2348 = vsel %vm2345, %v2347, %v2343
    %v2349 = vmul.f32 1.0, %v2348
    %v2350 = vrcp.pop %v1208
    %v2351 = vmul.f32 %v1208, %v2350
    %v2352 = vsub.f32 1.0, %v2351
    %v2353 = vmul.f32 %v2350, %v2352
    %v2354 = vadd.f32 %v2350, %v2353
    %vm2355 = vweird.f32 %v1208
    %vm2356 = vweird.f32 %v2350
    %vm2357 = vmor %vm2355, %vm2356
    %v2358 = vsel %vm2357, %v2350, %v2354
    %v2359 = vand.u32 2147483647, %v1208
    %vm2360 = vcmp.eq.f32.partialorder %v2359, 8.507059e+37
    %v2361 = vand.u32 %v1208, 2147483648
    %v2362 = vor.u32 1.1754944e-38, %v2361
    %v2363 = vsel %vm2360, %v2362, %v2358
    %v2364 = vmul.f32 1.0, %v2363
    %v2365 = vrcp.pop %v1209
    %v2366 = vmul.f32 %v1209, %v2365
    %v2367 = vsub.f32 1.0, %v2366
    %v2368 = vmul.f32 %v2365, %v2367
    %v2369 = vadd.f32 %v2365, %v2368
    %vm2370 = vweird.f32 %v1209
    %vm2371 = vweird.f32 %v2365
    %vm2372 = vmor %vm2370, %vm2371
    %v2373 = vsel %vm2372, %v2365, %v2369
    %v2374 = vand.u32 2147483647, %v1209
    %vm2375 = vcmp.eq.f32.partialorder %v2374, 8.507059e+37
    %v2376 = vand.u32 %v1209, 2147483648
    %v2377 = vor.u32 1.1754944e-38, %v2376
    %v2378 = vsel %vm2375, %v2377, %v2373
    %v2379 = vmul.f32 1.0, %v2378
    %v2380 = vmul.f32 %v464, %v1224
    %v2381 = vmul.f32 %v538, %v1239
    %v2382 = vmul.f32 %v612, %v1254
    %v2383 = vmul.f32 %v466, %v1269
    %v2384 = vmul.f32 %v540, %v1284
    %v2385 = vmul.f32 %v614, %v1299
    %v2386 = vmul.f32 %v469, %v1314
    %v2387 = vmul.f32 %v543, %v1329
    %v2388 = vmul.f32 %v617, %v1344
    %v2389 = vmul.f32 %v471, %v1359
    %v2390 = vmul.f32 %v545, %v1374
    %v2391 = vmul.f32 %v619, %v1389
    %v2392 = vmul.f32 %v474, %v1404
    %v2393 = vmul.f32 %v548, %v1419
    %v2394 = vmul.f32 %v622, %v1434
    %v2395 = vmul.f32 %v476, %v1449
    %v2396 = vmul.f32 %v550, %v1464
    %v2397 = vmul.f32 %v624, %v1479
    %v2398 = vmul.f32 %v479, %v1494
    %v2399 = vmul.f32 %v553, %v1509
    %v2400 = vmul.f32 %v627, %v1524
    %v2401 = vmul.f32 %v481, %v1539
    %v2402 = vmul.f32 %v555, %v1554
    %v2403 = vmul.f32 %v629, %v1569
    %v2404 = vmul.f32 %v484, %v1584
    %v2405 = vmul.f32 %v558, %v1599
    %v2406 = vmul.f32 %v632, %v1614
    %v2407 = vmul.f32 %v486, %v1629
    %v2408 = vmul.f32 %v560, %v1644
    %v2409 = vmul.f32 %v634, %v1659
    %v2410 = vmul.f32 %v489, %v1674
    %v2411 = vmul.f32 %v563, %v1689
    %v2412 = vmul.f32 %v637, %v1704
    %v2413 = vmul.f32 %v491, %v1719
    %v2414 = vmul.f32 %v565, %v1734
    %v2415 = vmul.f32 %v639, %v1749
    %v2416 = vmul.f32 %v494, %v1764
    %v2417 = vmul.f32 %v568, %v1779
    %v2418 = vmul.f32 %v642, %v1794
    %v2419 = vmul.f32 %v496, %v1809
    %v2420 = vmul.f32 %v570, %v1824
    %v2421 = vmul.f32 %v644, %v1839
    %v2422 = vmul.f32 %v499, %v1854
    %v2423 = vmul.f32 %v573, %v1869
    %v2424 = vmul.f32 %v647, %v1884
    %v2425 = vmul.f32 %v501, %v1899
    %v2426 = vmul.f32 %v575, %v1914
    %v2427 = vmul.f32 %v649, %v1929
    %v2428 = vmul.f32 %v504, %v1944
    %v2429 = vmul.f32 %v578, %v1959
    %v2430 = vmul.f32 %v652, %v1974
    %v2431 = vmul.f32 %v506, %v1989
    %v2432 = vmul.f32 %v580, %v2004
    %v2433 = vmul.f32 %v654, %v2019
    %v2434 = vmul.f32 %v509, %v2034
    %v2435 = vmul.f32 %v583, %v2049
    %v2436 = vmul.f32 %v657, %v2064
    %v2437 = vmul.f32 %v511, %v2079
    %v2438 = vmul.f32 %v585, %v2094
    %v2439 = vmul.f32 %v659, %v2109
    %v2440 = vmul.f32 %v514, %v2124
    %v2441 = vmul.f32 %v588, %v2139
    %v2442 = vmul.f32 %v662, %v2154
    %v2443 = vmul.f32 %v516, %v2169
    %v2444 = vmul.f32 %v590, %v2184
    %v2445 = vmul.f32 %v664, %v2199
    %v2446 = vmul.f32 %v519, %v2214
    %v2447 = vmul.f32 %v593, %v2229
    %v2448 = vmul.f32 %v667, %v2244
    %v2449 = vmul.f32 %v521, %v2259
    %v2450 = vmul.f32 %v595, %v2274
    %v2451 = vmul.f32 %v669, %v2289
    %v2452 = vmul.f32 %v524, %v2304
    %v2453 = vmul.f32 %v598, %v2319
    %v2454 = vmul.f32 %v672, %v2334
    %v2455 = vmul.f32 %v526, %v2349
    %v2456 = vmul.f32 %v600, %v2364
    %v2457 = vmul.f32 %v674, %v2379
    %v2458 = vmul.f32 %v2380, %v686
    %v2459 = vmul.f32 %v2381, %v760
    %v2460 = vmul.f32 %v2382, %v834
    %v2461 = vmul.f32 %v2383, %v688
    %v2462 = vmul.f32 %v2384, %v762
    %v2463 = vmul.f32 %v2385, %v836
    %v2464 = vmul.f32 %v2386, %v691
    %v2465 = vmul.f32 %v2387, %v765
    %v2466 = vmul.f32 %v2388, %v839
    %v2467 = vmul.f32 %v2389, %v693
    %v2468 = vmul.f32 %v2390, %v767
    %v2469 = vmul.f32 %v2391, %v841
    %v2470 = vmul.f32 %v2392, %v696
    %v2471 = vmul.f32 %v2393, %v770
    %v2472 = vmul.f32 %v2394, %v844
    %v2473 = vmul.f32 %v2395, %v698
    %v2474 = vmul.f32 %v2396, %v772
    %v2475 = vmul.f32 %v2397, %v846
    %v2476 = vmul.f32 %v2398, %v701
    %v2477 = vmul.f32 %v2399, %v775
    %v2478 = vmul.f32 %v2400, %v849
    %v2479 = vmul.f32 %v2401, %v703
    %v2480 = vmul.f32 %v2402, %v777
    %v2481 = vmul.f32 %v2403, %v851
    %v2482 = vmul.f32 %v2404, %v706
    %v2483 = vmul.f32 %v2405, %v780
    %v2484 = vmul.f32 %v2406, %v854
    %v2485 = vmul.f32 %v2407, %v708
    %v2486 = vmul.f32 %v2408, %v782
    %v2487 = vmul.f32 %v2409, %v856
    %v2488 = vmul.f32 %v2410, %v711
    %v2489 = vmul.f32 %v2411, %v785
    %v2490 = vmul.f32 %v2412, %v859
    %v2491 = vmul.f32 %v2413, %v713
    %v2492 = vmul.f32 %v2414, %v787
    %v2493 = vmul.f32 %v2415, %v861
    %v2494 = vmul.f32 %v2416, %v716
    %v2495 = vmul.f32 %v2417, %v790
    %v2496 = vmul.f32 %v2418, %v864
    %v2497 = vmul.f32 %v2419, %v718
    %v2498 = vmul.f32 %v2420, %v792
    %v2499 = vmul.f32 %v2421, %v866
    %v2500 = vmul.f32 %v2422, %v721
    %v2501 = vmul.f32 %v2423, %v795
    %v2502 = vmul.f32 %v2424, %v869
    %v2503 = vmul.f32 %v2425, %v723
    %v2504 = vmul.f32 %v2426, %v797
    %v2505 = vmul.f32 %v2427, %v871
    %v2506 = vmul.f32 %v2428, %v726
    %v2507 = vmul.f32 %v2429, %v800
    %v2508 = vmul.f32 %v2430, %v874
    %v2509 = vmul.f32 %v2431, %v728
    %v2510 = vmul.f32 %v2432, %v802
    %v2511 = vmul.f32 %v2433, %v876
    %v2512 = vmul.f32 %v2434, %v731
    %v2513 = vmul.f32 %v2435, %v805
    %v2514 = vmul.f32 %v2436, %v879
    %v2515 = vmul.f32 %v2437, %v733
    %v2516 = vmul.f32 %v2438, %v807
    %v2517 = vmul.f32 %v2439, %v881
    %v2518 = vmul.f32 %v2440, %v736
    %v2519 = vmul.f32 %v2441, %v810
    %v2520 = vmul.f32 %v2442, %v884
    %v2521 = vmul.f32 %v2443, %v738
    %v2522 = vmul.f32 %v2444, %v812
    %v2523 = vmul.f32 %v2445, %v886
    %v2524 = vmul.f32 %v2446, %v741
    %v2525 = vmul.f32 %v2447, %v815
    %v2526 = vmul.f32 %v2448, %v889
    %v2527 = vmul.f32 %v2449, %v743
    %v2528 = vmul.f32 %v2450, %v817
    %v2529 = vmul.f32 %v2451, %v891
    %v2530 = vmul.f32 %v2452, %v746
    %v2531 = vmul.f32 %v2453, %v820
    %v2532 = vmul.f32 %v2454, %v894
    %v2533 = vmul.f32 %v2455, %v748
    %v2534 = vmul.f32 %v2456, %v822
    %v2535 = vmul.f32 %v2457, %v896
    %v2536 = vpack.c.bf16 %v2461, %v2458
    %v2537 = vpack.c.bf16 %v2462, %v2459
    %v2538 = vpack.c.bf16 %v2463, %v2460
    %v2539 = vpack.c.bf16 %v2467, %v2464
    %v2540 = vpack.c.bf16 %v2468, %v2465
    %v2541 = vpack.c.bf16 %v2469, %v2466
    %v2542 = vpack.c.bf16 %v2473, %v2470
    %v2543 = vpack.c.bf16 %v2474, %v2471
    %v2544 = vpack.c.bf16 %v2475, %v2472
    %v2545 = vpack.c.bf16 %v2479, %v2476
    %v2546 = vpack.c.bf16 %v2480, %v2477
    %v2547 = vpack.c.bf16 %v2481, %v2478
    %v2548 = vpack.c.bf16 %v2485, %v2482
    %v2549 = vpack.c.bf16 %v2486, %v2483
    %v2550 = vpack.c.bf16 %v2487, %v2484
    %v2551 = vpack.c.bf16 %v2491, %v2488
    %v2552 = vpack.c.bf16 %v2492, %v2489
    %v2553 = vpack.c.bf16 %v2493, %v2490
    %v2554 = vpack.c.bf16 %v2497, %v2494
    %v2555 = vpack.c.bf16 %v2498, %v2495
    %v2556 = vpack.c.bf16 %v2499, %v2496
    %v2557 = vpack.c.bf16 %v2503, %v2500
    %v2558 = vpack.c.bf16 %v2504, %v2501
    %v2559 = vpack.c.bf16 %v2505, %v2502
    %v2560 = vpack.c.bf16 %v2509, %v2506
    %v2561 = vpack.c.bf16 %v2510, %v2507
    %v2562 = vpack.c.bf16 %v2511, %v2508
    %v2563 = vpack.c.bf16 %v2515, %v2512
    %v2564 = vpack.c.bf16 %v2516, %v2513
    %v2565 = vpack.c.bf16 %v2517, %v2514
    %v2566 = vpack.c.bf16 %v2521, %v2518
    %v2567 = vpack.c.bf16 %v2522, %v2519
    %v2568 = vpack.c.bf16 %v2523, %v2520
    %v2569 = vpack.c.bf16 %v2527, %v2524
    %v2570 = vpack.c.bf16 %v2528, %v2525
    %v2571 = vpack.c.bf16 %v2529, %v2526
    %v2572 = vpack.c.bf16 %v2533, %v2530
    %v2573 = vpack.c.bf16 %v2534, %v2531
    %v2574 = vpack.c.bf16 %v2535, %v2532
    %v2575 = vld [vmem:[#allocation7] sm:$0xf]
    %v2576 = vld [vmem:[#allocation7 + $0x4] sm:$0xf]
    %v2577 = vld [vmem:[#allocation7 + $0x8] sm:$0xf]
    %v2578 = vld [vmem:[#allocation7 + $0xc] sm:$0xf]
    %v2579 = vld [vmem:[#allocation7 + $0x10] sm:$0xf]
    %v2580 = vld [vmem:[#allocation7 + $0x14] sm:$0xf]
    %v2581 = vld [vmem:[#allocation7 + $0x18] sm:$0xf]
    %v2582 = vld [vmem:[#allocation7 + $0x1c] sm:$0xf]
    %v2583 = vld [vmem:[#allocation7 + $0x20] sm:$0xf]
    %v2584 = vld [vmem:[#allocation7 + $0x24] sm:$0xf]
    %v2585 = vld [vmem:[#allocation7 + $0x28] sm:$0xf]
    %v2586 = vld [vmem:[#allocation7 + $0x2c] sm:$0xf]
    %v2587 = vld [vmem:[#allocation7 + $0x30] sm:$0xf]
    %v2588 = vld [vmem:[#allocation7 + $0x34] sm:$0xf]
    %v2589 = vld [vmem:[#allocation7 + $0x38] sm:$0xf]
    %v2590 = vld [vmem:[#allocation7 + $0x3c] sm:$0xf]
    %v2591 = vld [vmem:[#allocation7 + $0x40] sm:$0xf]
    %v2592 = vld [vmem:[#allocation7 + $0x44] sm:$0xf]
    %v2593 = vld [vmem:[#allocation7 + $0x48] sm:$0xf]
    %v2594 = vld [vmem:[#allocation7 + $0x4c] sm:$0xf]
    %v2595 = vld [vmem:[#allocation7 + $0x50] sm:$0xf]
    %v2596 = vld [vmem:[#allocation7 + $0x54] sm:$0xf]
    %v2597 = vld [vmem:[#allocation7 + $0x58] sm:$0xf]
    %v2598 = vld [vmem:[#allocation7 + $0x5c] sm:$0xf]
    %v2599 = vld [vmem:[#allocation7 + $0x60] sm:$0xf]
    %v2600 = vld [vmem:[#allocation7 + $0x64] sm:$0xf]
    %v2601 = vld [vmem:[#allocation7 + $0x68] sm:$0xf]
    %v2602 = vld [vmem:[#allocation7 + $0x6c] sm:$0xf]
    %v2603 = vld [vmem:[#allocation7 + $0x70] sm:$0xf]
    %v2604 = vld [vmem:[#allocation7 + $0x74] sm:$0xf]
    %v2605 = vld [vmem:[#allocation7 + $0x78] sm:$0xf]
    %v2606 = vld [vmem:[#allocation7 + $0x7c] sm:$0xf]
    %v2607 = vld [vmem:[#allocation7 + $0x80] sm:$0xf]
    %v2608 = vld [vmem:[#allocation7 + $0x84] sm:$0xf]
    %v2609 = vld [vmem:[#allocation7 + $0x88] sm:$0xf]
    %v2610 = vld [vmem:[#allocation7 + $0x8c] sm:$0xf]
    %v2611 = vld [vmem:[#allocation7 + $0x90] sm:$0xf]
    %v2612 = vld [vmem:[#allocation7 + $0x94] sm:$0xf]
    %v2613 = vld [vmem:[#allocation7 + $0x98] sm:$0xf]
    %v2614 = vld [vmem:[#allocation7 + $0x9c] sm:$0xf]
    %v2615 = vld [vmem:[#allocation7 + $0xa0] sm:$0xf]
    %v2616 = vld [vmem:[#allocation7 + $0xa4] sm:$0xf]
    %v2617 = vld [vmem:[#allocation7 + $0xa8] sm:$0xf]
    %v2618 = vld [vmem:[#allocation7 + $0xac] sm:$0xf]
    %v2619 = vld [vmem:[#allocation7 + $0xb0] sm:$0xf]
    %v2620 = vld [vmem:[#allocation7 + $0xb4] sm:$0xf]
    %v2621 = vld [vmem:[#allocation7 + $0xb8] sm:$0xf]
    %v2622 = vld [vmem:[#allocation7 + $0xbc] sm:$0xf]
    %v2671 = vunpack.c.l.b16 %v2575
    %v2672 = vunpack.c.l.b16 %v2576
    %v2673 = vunpack.c.l.b16 %v2577
    %v2674 = vunpack.c.l.b16 %v2578
    %v2675 = vunpack.c.l.b16 %v2579
    %v2676 = vunpack.c.l.b16 %v2580
    %v2677 = vunpack.c.l.b16 %v2581
    %v2678 = vunpack.c.l.b16 %v2582
    %v2679 = vunpack.c.l.b16 %v2583
    %v2680 = vunpack.c.l.b16 %v2584
    %v2681 = vunpack.c.l.b16 %v2585
    %v2682 = vunpack.c.l.b16 %v2586
    %v2683 = vunpack.c.l.b16 %v2587
    %v2684 = vunpack.c.l.b16 %v2588
    %v2685 = vunpack.c.l.b16 %v2589
    %v2686 = vunpack.c.l.b16 %v2590
    %v2687 = vunpack.c.l.b16 %v2591
    %v2688 = vunpack.c.l.b16 %v2592
    %v2689 = vunpack.c.l.b16 %v2593
    %v2690 = vunpack.c.l.b16 %v2594
    %v2691 = vunpack.c.l.b16 %v2595
    %v2692 = vunpack.c.l.b16 %v2596
    %v2693 = vunpack.c.l.b16 %v2597
    %v2694 = vunpack.c.l.b16 %v2598
    %v2695 = vunpack.c.l.b16 %v2599
    %v2696 = vunpack.c.l.b16 %v2600
    %v2697 = vunpack.c.l.b16 %v2601
    %v2698 = vunpack.c.l.b16 %v2602
    %v2699 = vunpack.c.l.b16 %v2603
    %v2700 = vunpack.c.l.b16 %v2604
    %v2701 = vunpack.c.l.b16 %v2605
    %v2702 = vunpack.c.l.b16 %v2606
    %v2703 = vunpack.c.l.b16 %v2607
    %v2704 = vunpack.c.l.b16 %v2608
    %v2705 = vunpack.c.l.b16 %v2609
    %v2706 = vunpack.c.l.b16 %v2610
    %v2707 = vunpack.c.l.b16 %v2611
    %v2708 = vunpack.c.l.b16 %v2612
    %v2709 = vunpack.c.l.b16 %v2613
    %v2710 = vunpack.c.l.b16 %v2614
    %v2711 = vunpack.c.l.b16 %v2615
    %v2712 = vunpack.c.l.b16 %v2616
    %v2713 = vunpack.c.l.b16 %v2617
    %v2714 = vunpack.c.l.b16 %v2618
    %v2715 = vunpack.c.l.b16 %v2619
    %v2716 = vunpack.c.l.b16 %v2620
    %v2717 = vunpack.c.l.b16 %v2621
    %v2718 = vunpack.c.l.b16 %v2622
    %v2719 = vpack.c.b16 %v2672, %v2671
    %v2720 = vpack.c.b16 %v2674, %v2673
    %v2721 = vpack.c.b16 %v2676, %v2675
    %v2722 = vpack.c.b16 %v2678, %v2677
    %v2723 = vpack.c.b16 %v2680, %v2679
    %v2724 = vpack.c.b16 %v2682, %v2681
    %v2725 = vpack.c.b16 %v2684, %v2683
    %v2726 = vpack.c.b16 %v2686, %v2685
    %v2727 = vpack.c.b16 %v2688, %v2687
    %v2728 = vpack.c.b16 %v2690, %v2689
    %v2729 = vpack.c.b16 %v2692, %v2691
    %v2730 = vpack.c.b16 %v2694, %v2693
    %v2731 = vpack.c.b16 %v2696, %v2695
    %v2732 = vpack.c.b16 %v2698, %v2697
    %v2733 = vpack.c.b16 %v2700, %v2699
    %v2734 = vpack.c.b16 %v2702, %v2701
    %v2735 = vpack.c.b16 %v2704, %v2703
    %v2736 = vpack.c.b16 %v2706, %v2705
    %v2737 = vpack.c.b16 %v2708, %v2707
    %v2738 = vpack.c.b16 %v2710, %v2709
    %v2739 = vpack.c.b16 %v2712, %v2711
    %v2740 = vpack.c.b16 %v2714, %v2713
    %v2741 = vpack.c.b16 %v2716, %v2715
    %v2742 = vpack.c.b16 %v2718, %v2717
    %2767 = vmatpush.bf16.msra.mxu0 %v2726
    %2768 = vmatpush.bf16.msra.mxu0 %v2725
    %2769 = vmatpush.bf16.msra.mxu0 %v2724
    %2770 = vmatpush.bf16.msra.mxu0 %v2723
    %2771 = vmatpush.bf16.msra.mxu0 %v2722
    %2772 = vmatpush.bf16.msra.mxu0 %v2721
    %2773 = vmatpush.bf16.msra.mxu0 %v2720
    %2774 = vmatpush.bf16.msra.mxu0 %v2719
    %2775 = vmatmul.bf16.gmra.mxu0 %v2536
    %v2776 = vpop.f32.mrf.mxu0
    %v2777 = vadd.f32 0.0, %v2776
    %v2778 = vpop.f32.mrf.mxu0
    %v2779 = vadd.f32 0.0, %v2778
    %2780 = vmatmul.bf16.gmra.mxu0 %v2539
    %v2781 = vpop.f32.mrf.mxu0
    %v2782 = vadd.f32 0.0, %v2781
    %v2783 = vpop.f32.mrf.mxu0
    %v2784 = vadd.f32 0.0, %v2783
    %2785 = vmatmul.bf16.gmra.mxu0 %v2542
    %v2786 = vpop.f32.mrf.mxu0
    %v2787 = vadd.f32 0.0, %v2786
    %v2788 = vpop.f32.mrf.mxu0
    %v2789 = vadd.f32 0.0, %v2788
    %2790 = vmatmul.bf16.gmra.mxu0 %v2545
    %v2791 = vpop.f32.mrf.mxu0
    %v2792 = vadd.f32 0.0, %v2791
    %v2793 = vpop.f32.mrf.mxu0
    %v2794 = vadd.f32 0.0, %v2793
    %2795 = vmatmul.bf16.gmra.mxu0 %v2548
    %v2796 = vpop.f32.mrf.mxu0
    %v2797 = vadd.f32 0.0, %v2796
    %v2798 = vpop.f32.mrf.mxu0
    %v2799 = vadd.f32 0.0, %v2798
    %2800 = vmatmul.bf16.gmra.mxu0 %v2551
    %v2801 = vpop.f32.mrf.mxu0
    %v2802 = vadd.f32 0.0, %v2801
    %v2803 = vpop.f32.mrf.mxu0
    %v2804 = vadd.f32 0.0, %v2803
    %2805 = vmatmul.bf16.gmra.mxu0 %v2554
    %v2806 = vpop.f32.mrf.mxu0
    %v2807 = vadd.f32 0.0, %v2806
    %v2808 = vpop.f32.mrf.mxu0
    %v2809 = vadd.f32 0.0, %v2808
    %2810 = vmatmul.bf16.gmra.mxu0 %v2557
    %v2811 = vpop.f32.mrf.mxu0
    %v2812 = vadd.f32 0.0, %v2811
    %v2813 = vpop.f32.mrf.mxu0
    %v2814 = vadd.f32 0.0, %v2813
    %2815 = vmatmul.bf16.gmra.mxu0 %v2560
    %v2816 = vpop.f32.mrf.mxu0
    %v2817 = vadd.f32 0.0, %v2816
    %v2818 = vpop.f32.mrf.mxu0
    %v2819 = vadd.f32 0.0, %v2818
    %2820 = vmatmul.bf16.gmra.mxu0 %v2563
    %v2821 = vpop.f32.mrf.mxu0
    %v2822 = vadd.f32 0.0, %v2821
    %v2823 = vpop.f32.mrf.mxu0
    %v2824 = vadd.f32 0.0, %v2823
    %2825 = vmatmul.bf16.gmra.mxu0 %v2566
    %v2826 = vpop.f32.mrf.mxu0
    %v2827 = vadd.f32 0.0, %v2826
    %v2828 = vpop.f32.mrf.mxu0
    %v2829 = vadd.f32 0.0, %v2828
    %2830 = vmatmul.bf16.gmra.mxu0 %v2569
    %v2831 = vpop.f32.mrf.mxu0
    %v2832 = vadd.f32 0.0, %v2831
    %v2833 = vpop.f32.mrf.mxu0
    %v2834 = vadd.f32 0.0, %v2833
    %2835 = vmatmul.bf16.gmra.mxu0 %v2572
    %v2836 = vpop.f32.mrf.mxu0
    %v2837 = vadd.f32 0.0, %v2836
    %v2838 = vpop.f32.mrf.mxu0
    %v2839 = vadd.f32 0.0, %v2838
    %2840 = vdwg.mxu0
    %2841 = vmatpush.bf16.msra.mxu0 %v2734
    %2842 = vmatpush.bf16.msra.mxu0 %v2733
    %2843 = vmatpush.bf16.msra.mxu0 %v2732
    %2844 = vmatpush.bf16.msra.mxu0 %v2731
    %2845 = vmatpush.bf16.msra.mxu0 %v2730
    %2846 = vmatpush.bf16.msra.mxu0 %v2729
    %2847 = vmatpush.bf16.msra.mxu0 %v2728
    %2848 = vmatpush.bf16.msra.mxu0 %v2727
    %2849 = vmatmul.bf16.gmra.mxu0 %v2537
    %v2850 = vpop.f32.mrf.mxu0
    %v2851 = vadd.f32 %v2777, %v2850
    %v2852 = vpop.f32.mrf.mxu0
    %v2853 = vadd.f32 %v2779, %v2852
    %2854 = vmatmul.bf16.gmra.mxu0 %v2540
    %v2855 = vpop.f32.mrf.mxu0
    %v2856 = vadd.f32 %v2782, %v2855
    %v2857 = vpop.f32.mrf.mxu0
    %v2858 = vadd.f32 %v2784, %v2857
    %2859 = vmatmul.bf16.gmra.mxu0 %v2543
    %v2860 = vpop.f32.mrf.mxu0
    %v2861 = vadd.f32 %v2787, %v2860
    %v2862 = vpop.f32.mrf.mxu0
    %v2863 = vadd.f32 %v2789, %v2862
    %2864 = vmatmul.bf16.gmra.mxu0 %v2546
    %v2865 = vpop.f32.mrf.mxu0
    %v2866 = vadd.f32 %v2792, %v2865
    %v2867 = vpop.f32.mrf.mxu0
    %v2868 = vadd.f32 %v2794, %v2867
    %2869 = vmatmul.bf16.gmra.mxu0 %v2549
    %v2870 = vpop.f32.mrf.mxu0
    %v2871 = vadd.f32 %v2797, %v2870
    %v2872 = vpop.f32.mrf.mxu0
    %v2873 = vadd.f32 %v2799, %v2872
    %2874 = vmatmul.bf16.gmra.mxu0 %v2552
    %v2875 = vpop.f32.mrf.mxu0
    %v2876 = vadd.f32 %v2802, %v2875
    %v2877 = vpop.f32.mrf.mxu0
    %v2878 = vadd.f32 %v2804, %v2877
    %2879 = vmatmul.bf16.gmra.mxu0 %v2555
    %v2880 = vpop.f32.mrf.mxu0
    %v2881 = vadd.f32 %v2807, %v2880
    %v2882 = vpop.f32.mrf.mxu0
    %v2883 = vadd.f32 %v2809, %v2882
    %2884 = vmatmul.bf16.gmra.mxu0 %v2558
    %v2885 = vpop.f32.mrf.mxu0
    %v2886 = vadd.f32 %v2812, %v2885
    %v2887 = vpop.f32.mrf.mxu0
    %v2888 = vadd.f32 %v2814, %v2887
    %2889 = vmatmul.bf16.gmra.mxu0 %v2561
    %v2890 = vpop.f32.mrf.mxu0
    %v2891 = vadd.f32 %v2817, %v2890
    %v2892 = vpop.f32.mrf.mxu0
    %v2893 = vadd.f32 %v2819, %v2892
    %2894 = vmatmul.bf16.gmra.mxu0 %v2564
    %v2895 = vpop.f32.mrf.mxu0
    %v2896 = vadd.f32 %v2822, %v2895
    %v2897 = vpop.f32.mrf.mxu0
    %v2898 = vadd.f32 %v2824, %v2897
    %2899 = vmatmul.bf16.gmra.mxu0 %v2567
    %v2900 = vpop.f32.mrf.mxu0
    %v2901 = vadd.f32 %v2827, %v2900
    %v2902 = vpop.f32.mrf.mxu0
    %v2903 = vadd.f32 %v2829, %v2902
    %2904 = vmatmul.bf16.gmra.mxu0 %v2570
    %v2905 = vpop.f32.mrf.mxu0
    %v2906 = vadd.f32 %v2832, %v2905
    %v2907 = vpop.f32.mrf.mxu0
    %v2908 = vadd.f32 %v2834, %v2907
    %2909 = vmatmul.bf16.gmra.mxu0 %v2573
    %v2910 = vpop.f32.mrf.mxu0
    %v2911 = vadd.f32 %v2837, %v2910
    %v2912 = vpop.f32.mrf.mxu0
    %v2913 = vadd.f32 %v2839, %v2912
    %2914 = vdwg.mxu0
    %2915 = vmatpush.bf16.msra.mxu0 %v2742
    %2916 = vmatpush.bf16.msra.mxu0 %v2741
    %2917 = vmatpush.bf16.msra.mxu0 %v2740
    %2918 = vmatpush.bf16.msra.mxu0 %v2739
    %2919 = vmatpush.bf16.msra.mxu0 %v2738
    %2920 = vmatpush.bf16.msra.mxu0 %v2737
    %2921 = vmatpush.bf16.msra.mxu0 %v2736
    %2922 = vmatpush.bf16.msra.mxu0 %v2735
    %2923 = vmatmul.bf16.gmra.mxu0 %v2538
    %v2924 = vpop.f32.mrf.mxu0
    %v2925 = vadd.f32 %v2851, %v2924
    %v2926 = vpop.f32.mrf.mxu0
    %v2927 = vadd.f32 %v2853, %v2926
    %2928 = vmatmul.bf16.gmra.mxu0 %v2541
    %v2929 = vpop.f32.mrf.mxu0
    %v2930 = vadd.f32 %v2856, %v2929
    %v2931 = vpop.f32.mrf.mxu0
    %v2932 = vadd.f32 %v2858, %v2931
    %2933 = vmatmul.bf16.gmra.mxu0 %v2544
    %v2934 = vpop.f32.mrf.mxu0
    %v2935 = vadd.f32 %v2861, %v2934
    %v2936 = vpop.f32.mrf.mxu0
    %v2937 = vadd.f32 %v2863, %v2936
    %2938 = vmatmul.bf16.gmra.mxu0 %v2547
    %v2939 = vpop.f32.mrf.mxu0
    %v2940 = vadd.f32 %v2866, %v2939
    %v2941 = vpop.f32.mrf.mxu0
    %v2942 = vadd.f32 %v2868, %v2941
    %2943 = vmatmul.bf16.gmra.mxu0 %v2550
    %v2944 = vpop.f32.mrf.mxu0
    %v2945 = vadd.f32 %v2871, %v2944
    %v2946 = vpop.f32.mrf.mxu0
    %v2947 = vadd.f32 %v2873, %v2946
    %2948 = vmatmul.bf16.gmra.mxu0 %v2553
    %v2949 = vpop.f32.mrf.mxu0
    %v2950 = vadd.f32 %v2876, %v2949
    %v2951 = vpop.f32.mrf.mxu0
    %v2952 = vadd.f32 %v2878, %v2951
    %2953 = vmatmul.bf16.gmra.mxu0 %v2556
    %v2954 = vpop.f32.mrf.mxu0
    %v2955 = vadd.f32 %v2881, %v2954
    %v2956 = vpop.f32.mrf.mxu0
    %v2957 = vadd.f32 %v2883, %v2956
    %2958 = vmatmul.bf16.gmra.mxu0 %v2559
    %v2959 = vpop.f32.mrf.mxu0
    %v2960 = vadd.f32 %v2886, %v2959
    %v2961 = vpop.f32.mrf.mxu0
    %v2962 = vadd.f32 %v2888, %v2961
    %2963 = vmatmul.bf16.gmra.mxu0 %v2562
    %v2964 = vpop.f32.mrf.mxu0
    %v2965 = vadd.f32 %v2891, %v2964
    %v2966 = vpop.f32.mrf.mxu0
    %v2967 = vadd.f32 %v2893, %v2966
    %2968 = vmatmul.bf16.gmra.mxu0 %v2565
    %v2969 = vpop.f32.mrf.mxu0
    %v2970 = vadd.f32 %v2896, %v2969
    %v2971 = vpop.f32.mrf.mxu0
    %v2972 = vadd.f32 %v2898, %v2971
    %2973 = vmatmul.bf16.gmra.mxu0 %v2568
    %v2974 = vpop.f32.mrf.mxu0
    %v2975 = vadd.f32 %v2901, %v2974
    %v2976 = vpop.f32.mrf.mxu0
    %v2977 = vadd.f32 %v2903, %v2976
    %2978 = vmatmul.bf16.gmra.mxu0 %v2571
    %v2979 = vpop.f32.mrf.mxu0
    %v2980 = vadd.f32 %v2906, %v2979
    %v2981 = vpop.f32.mrf.mxu0
    %v2982 = vadd.f32 %v2908, %v2981
    %2983 = vmatmul.bf16.gmra.mxu0 %v2574
    %v2984 = vpop.f32.mrf.mxu0
    %v2985 = vadd.f32 %v2911, %v2984
    %v2986 = vpop.f32.mrf.mxu0
    %v2987 = vadd.f32 %v2913, %v2986
    %2988 = vdwg.mxu0
    %v2989 = vpack.c.bf16 %v2925, %v2925
    %v2990 = vpack.c.bf16 %v2927, %v2927
    %v2991 = vpack.c.bf16 %v2930, %v2930
    %v2992 = vpack.c.bf16 %v2932, %v2932
    %v2993 = vpack.c.bf16 %v2935, %v2935
    %v2994 = vpack.c.bf16 %v2937, %v2937
    %v2995 = vpack.c.bf16 %v2940, %v2940
    %v2996 = vpack.c.bf16 %v2942, %v2942
    %v2997 = vpack.c.bf16 %v2945, %v2945
    %v2998 = vpack.c.bf16 %v2947, %v2947
    %v2999 = vpack.c.bf16 %v2950, %v2950
    %v3000 = vpack.c.bf16 %v2952, %v2952
    %v3001 = vpack.c.bf16 %v2955, %v2955
    %v3002 = vpack.c.bf16 %v2957, %v2957
    %v3003 = vpack.c.bf16 %v2960, %v2960
    %v3004 = vpack.c.bf16 %v2962, %v2962
    %v3005 = vpack.c.bf16 %v2965, %v2965
    %v3006 = vpack.c.bf16 %v2967, %v2967
    %v3007 = vpack.c.bf16 %v2970, %v2970
    %v3008 = vpack.c.bf16 %v2972, %v2972
    %v3009 = vpack.c.bf16 %v2975, %v2975
    %v3010 = vpack.c.bf16 %v2977, %v2977
    %v3011 = vpack.c.bf16 %v2980, %v2980
    %v3012 = vpack.c.bf16 %v2982, %v2982
    %v3013 = vpack.c.bf16 %v2985, %v2985
    %v3014 = vpack.c.bf16 %v2987, %v2987
    %3015 = vst [vmem:[#allocation8] sm:$0xf] %v2989
    %3016 = vst [vmem:[#allocation8 + $0x4] sm:$0xf] %v2990
    %3017 = vst [vmem:[#allocation8 + $0x8] sm:$0xf] %v2991
    %3018 = vst [vmem:[#allocation8 + $0xc] sm:$0xf] %v2992
    %3019 = vst [vmem:[#allocation8 + $0x10] sm:$0xf] %v2993
    %3020 = vst [vmem:[#allocation8 + $0x14] sm:$0xf] %v2994
    %3021 = vst [vmem:[#allocation8 + $0x18] sm:$0xf] %v2995
    %3022 = vst [vmem:[#allocation8 + $0x1c] sm:$0xf] %v2996
    %3023 = vst [vmem:[#allocation8 + $0x20] sm:$0xf] %v2997
    %3024 = vst [vmem:[#allocation8 + $0x24] sm:$0xf] %v2998
    %3025 = vst [vmem:[#allocation8 + $0x28] sm:$0xf] %v2999
    %3026 = vst [vmem:[#allocation8 + $0x2c] sm:$0xf] %v3000
    %3027 = vst [vmem:[#allocation8 + $0x30] sm:$0xf] %v3001
    %3028 = vst [vmem:[#allocation8 + $0x34] sm:$0xf] %v3002
    %3029 = vst [vmem:[#allocation8 + $0x38] sm:$0xf] %v3003
    %3030 = vst [vmem:[#allocation8 + $0x3c] sm:$0xf] %v3004
    %3031 = vst [vmem:[#allocation8 + $0x40] sm:$0xf] %v3005
    %3032 = vst [vmem:[#allocation8 + $0x44] sm:$0xf] %v3006
    %3033 = vst [vmem:[#allocation8 + $0x48] sm:$0xf] %v3007
    %3034 = vst [vmem:[#allocation8 + $0x4c] sm:$0xf] %v3008
    %3035 = vst [vmem:[#allocation8 + $0x50] sm:$0xf] %v3009
    %3036 = vst [vmem:[#allocation8 + $0x54] sm:$0xf] %v3010
    %3037 = vst [vmem:[#allocation8 + $0x58] sm:$0xf] %v3011
    %3038 = vst [vmem:[#allocation8 + $0x5c] sm:$0xf] %v3012
    %3039 = vst [vmem:[#allocation8 + $0x60] sm:$0xf] %v3013
    %3040 = vst [vmem:[#allocation8 + $0x64] sm:$0xf] %v3014
    // Predicated region
    $region26: #{_mlp_resident_call.1} parent=1 // pred_check
      _
    $region27: #{_mlp_resident_call.1} parent=1 // pred_check_branch
      %3042 = sbr.rel (0) target = $region29
    $region28: #{_mlp_resident_call.1} parent=1 // pred_region
      %3044 = vsyncadd [#allocation4], 0
      %s3045 = sshll.u32 [#allocation8], 4
      %s3046 = int_to_ptr.vmem [resolvable:$true] %s3045
      %s3047 = sshll.u32 %s3, 4
      %s3048 = int_to_ptr.hbm [resolvable:$true] %s3047
      %3053 = dma.vmem_to_hbm [thread:$0]  %s3046, 1664, %s3048, [#allocation4], 64, 64, 4
    $region29: #{_mlp_resident_call.1} parent=1 // pred_fallthru
      _
    // Predicated region
    $region30: #{_mlp_resident_call.1} parent=1 // pred_check
      _
    $region31: #{_mlp_resident_call.1} parent=1 // pred_check_branch
      %3055 = sbr.rel (0) target = $region33
    $region32: #{_mlp_resident_call.1} parent=1 // pred_region
      %3057 = dma.done [#allocation4], 1664
    $region33: #{_mlp_resident_call.1} parent=1 // pred_fallthru
      _
    %3058 = vsyncpa [#allocation3], 1
    %3059 = vsyncpa [#allocation6], 1
    %3060 = vsyncpa [#allocation4], 1

</llo_original>
